<compile_context>
chip_gen: v5e
topology: v5e:2x2
jax: 0.10.0
libtpu: 0.0.40
codegen_flags: <defaults>
</compile_context>

<pallas_src>
import functools
import math

import jax
import jax.numpy as jnp
from jax.experimental import pallas as pl
from jax.experimental.pallas import tpu as pltpu

# ---- config (small, consistent with the module) ----
B, T, C = 2, 8, 32          # batch, block_size (seq), n_embed
N_HEAD = 4
HEAD_DIM = C // N_HEAD
LN_EPS = 1e-5               # PyTorch nn.LayerNorm default


def _layernorm(x, gamma, beta):
    mean = jnp.mean(x, axis=-1, keepdims=True)
    var = jnp.mean((x - mean) ** 2, axis=-1, keepdims=True)
    return (x - mean) * jax.lax.rsqrt(var + LN_EPS) * gamma + beta


def _gelu_tanh(x):
    # nn.GELU(approximate='tanh')
    c = math.sqrt(2.0 / math.pi)
    return 0.5 * x * (1.0 + jnp.tanh(c * (x + 0.044715 * x * x * x)))


def block_kernel(x_ref,
                 ln1_g_ref, ln1_b_ref,
                 w_attn_ref, b_attn_ref,
                 w_aproj_ref, b_aproj_ref,
                 ln2_g_ref, ln2_b_ref,
                 w_fc_ref, b_fc_ref,
                 w_mproj_ref, b_mproj_ref,
                 o_ref, *, n_head, head_dim, n_embed):
    t = x_ref.shape[0]                       # one batch element's (T, C) rows
    x = x_ref[...]

    # ---------------- ln_1 ----------------
    h = _layernorm(x, ln1_g_ref[...], ln1_b_ref[...])

    # ---- fused, lane-dense QKV projection: (T, C) @ (C, 3C) -> (T, 3C) ----
    qkv = jnp.dot(h, w_attn_ref[...],
                  preferred_element_type=jnp.float32) + b_attn_ref[...]

    # ---- per-program causal additive bias (T, T); no batch cross-terms ----
    row = jax.lax.broadcasted_iota(jnp.int32, (t, t), 0)
    col = jax.lax.broadcasted_iota(jnp.int32, (t, t), 1)
    mask_bias = jnp.where(col <= row, 0.0, -1e30).astype(jnp.float32)

    scale = 1.0 / math.sqrt(head_dim)

    # ---------------- causal self-attention (per-head) ----------------
    # Accumulate the output projection per head (no concat of head outputs);
    # two accumulators break the serial f32 add chain across heads.
    accs = [jnp.zeros((t, n_embed), jnp.float32),
            jnp.zeros((t, n_embed), jnp.float32)]
    for hh in range(n_head):                 # static unroll over heads
        lo = hh * head_dim
        q_h = qkv[:, 0 * n_embed + lo: 0 * n_embed + lo + head_dim]
        k_h = qkv[:, 1 * n_embed + lo: 1 * n_embed + lo + head_dim]
        v_h = qkv[:, 2 * n_embed + lo: 2 * n_embed + lo + head_dim]
        # scores[i, j] = q_h[i] . k_h[j]
        scores = jax.lax.dot_general(
            q_h, k_h, (((1,), (1,)), ((), ())),
            preferred_element_type=jnp.float32) * scale + mask_bias
        scores = scores - jnp.max(scores, axis=-1, keepdims=True)
        p = jnp.exp(scores)
        p = p * pl.reciprocal(jnp.sum(p, axis=-1, keepdims=True), approx=True)
        y_h = jnp.dot(p, v_h, preferred_element_type=jnp.float32)   # (T, D)
        # sublane slice of the lane-dense (C, C) projection weight
        w_proj_h = w_aproj_ref[lo:lo + head_dim, :]                  # (D, C)
        accs[hh & 1] = accs[hh & 1] + jnp.dot(
            y_h, w_proj_h, preferred_element_type=jnp.float32)

    x1 = x + (accs[0] + accs[1]) + b_aproj_ref[...]   # first residual

    # ---------------- ln_2 + MLP ----------------
    h2 = _layernorm(x1, ln2_g_ref[...], ln2_b_ref[...])
    fc = jnp.dot(h2, w_fc_ref[...],
                 preferred_element_type=jnp.float32) + b_fc_ref[...]
    fc = _gelu_tanh(fc)
    mlp_out = jnp.dot(fc, w_mproj_ref[...],
                      preferred_element_type=jnp.float32) + b_mproj_ref[...]

    o_ref[...] = (x1 + mlp_out).astype(o_ref.dtype)   # second residual


def gpt_block(x, params):
    (ln1_g, ln1_b, w_attn, b_attn, w_aproj, b_aproj,
     ln2_g, ln2_b, w_fc, b_fc, w_mproj, b_mproj) = params
    Bx, Tx, Cx = x.shape
    H = N_HEAD
    D = Cx // H

    x2d = x.reshape(Bx * Tx, Cx)             # batch folded into rows; one
                                             # batch element = Tx contiguous rows

    kernel = functools.partial(block_kernel, n_head=H, head_dim=D, n_embed=Cx)

    def whole(arr):
        # Full-array block, constant block index -> DMA'd once, kept resident.
        return pl.BlockSpec(arr.shape, lambda b: (0,) * arr.ndim)

    out2d = pl.pallas_call(
        kernel,
        out_shape=jax.ShapeDtypeStruct((Bx * Tx, Cx), x.dtype),
        grid=(Bx,),
        in_specs=[
            pl.BlockSpec((Tx, Cx), lambda b: (b, 0)),   # this batch's rows
            whole(ln1_g), whole(ln1_b),
            whole(w_attn), whole(b_attn),
            whole(w_aproj), whole(b_aproj),
            whole(ln2_g), whole(ln2_b),
            whole(w_fc), whole(b_fc),
            whole(w_mproj), whole(b_mproj),
        ],
        out_specs=pl.BlockSpec((Tx, Cx), lambda b: (b, 0)),
        compiler_params=pltpu.CompilerParams(
            dimension_semantics=("parallel",)),          # v7x megacore sharding
    )(x2d,
      ln1_g, ln1_b,
      w_attn, b_attn,
      w_aproj, b_aproj,
      ln2_g, ln2_b,
      w_fc, b_fc,
      w_mproj, b_mproj)

    return out2d.reshape(Bx, Tx, Cx)


def _reference_block(x, params):
    """Pure-JAX reference mirroring the PyTorch Block."""
    (ln1_g, ln1_b, w_attn, b_attn, w_aproj, b_aproj,
     ln2_g, ln2_b, w_fc, b_fc, w_mproj, b_mproj) = params
    Bx, Tx, Cx = x.shape
    H = N_HEAD
    D = Cx // H

    h = _layernorm(x, ln1_g, ln1_b)
    qkv = h @ w_attn + b_attn
    q, k, v = jnp.split(qkv, 3, axis=-1)
    q = q.reshape(Bx, Tx, H, D).transpose(0, 2, 1, 3)
    k = k.reshape(Bx, Tx, H, D).transpose(0, 2, 1, 3)
    v = v.reshape(Bx, Tx, H, D).transpose(0, 2, 1, 3)
    s = jnp.einsum('bhqd,bhkd->bhqk', q, k) / math.sqrt(D)
    causal = jnp.tril(jnp.ones((Tx, Tx), bool))
    s = jnp.where(causal, s, -jnp.inf)
    p = jax.nn.softmax(s, axis=-1)
    y = jnp.einsum('bhqk,bhkd->bhqd', p, v)
    y = y.transpose(0, 2, 1, 3).reshape(Bx, Tx, Cx)
    x1 = x + (y @ w_aproj + b_aproj)
    h2 = _layernorm(x1, ln2_g, ln2_b)
    mlp = _gelu_tanh(h2 @ w_fc + b_fc) @ w_mproj + b_mproj
    return x1 + mlp


def init_params(key):
    """Deterministic synthetic parameters (PyTorch shapes, stored as (in, out))."""
    ks = jax.random.split(key, 4)
    std = 0.02
    ln1_g = jnp.ones((1, C), jnp.float32)
    ln1_b = jnp.zeros((1, C), jnp.float32)
    w_attn = std * jax.random.normal(ks[0], (C, 3 * C), jnp.float32)
    b_attn = jnp.zeros((1, 3 * C), jnp.float32)
    w_aproj = std * jax.random.normal(ks[1], (C, C), jnp.float32)
    b_aproj = jnp.zeros((1, C), jnp.float32)
    ln2_g = jnp.ones((1, C), jnp.float32)
    ln2_b = jnp.zeros((1, C), jnp.float32)
    w_fc = std * jax.random.normal(ks[2], (C, 4 * C), jnp.float32)
    b_fc = jnp.zeros((1, 4 * C), jnp.float32)
    w_mproj = std * jax.random.normal(ks[3], (4 * C, C), jnp.float32)
    b_mproj = jnp.zeros((1, C), jnp.float32)
    return (ln1_g, ln1_b, w_attn, b_attn, w_aproj, b_aproj,
            ln2_g, ln2_b, w_fc, b_fc, w_mproj, b_mproj)


if __name__ == "__main__":
    key = jax.random.PRNGKey(0)
    kx, kp = jax.random.split(key)
    x = jax.random.normal(kx, (B, T, C), jnp.float32)
    params = init_params(kp)

    out = gpt_block(x, params)
    jax.block_until_ready(out)
    assert out.shape == (B, T, C)

    ref = _reference_block(x, params)
    assert jnp.allclose(out, ref, rtol=2e-2, atol=2e-2), "kernel/reference mismatch"

    print("KERNEL_OK")
</pallas_src>

<mosaic_0001>
module attributes {stable_mosaic.version = 11 : i64} {
  func.func @block_kernel(%arg0: i32, %arg1: memref<8x32xf32, #tpu.memory_space<vmem>>, %arg2: memref<1x32xf32, #tpu.memory_space<vmem>>, %arg3: memref<1x32xf32, #tpu.memory_space<vmem>>, %arg4: memref<32x96xf32, #tpu.memory_space<vmem>>, %arg5: memref<1x96xf32, #tpu.memory_space<vmem>>, %arg6: memref<32x32xf32, #tpu.memory_space<vmem>>, %arg7: memref<1x32xf32, #tpu.memory_space<vmem>>, %arg8: memref<1x32xf32, #tpu.memory_space<vmem>>, %arg9: memref<1x32xf32, #tpu.memory_space<vmem>>, %arg10: memref<32x128xf32, #tpu.memory_space<vmem>>, %arg11: memref<1x128xf32, #tpu.memory_space<vmem>>, %arg12: memref<128x32xf32, #tpu.memory_space<vmem>>, %arg13: memref<1x32xf32, #tpu.memory_space<vmem>>, %arg14: memref<8x32xf32, #tpu.memory_space<vmem>>) attributes {dimension_semantics = [#tpu.dimension_semantics<parallel>], iteration_bounds = array<i64: 2>, scalar_prefetch = 0 : i64, scratch_operands = 0 : i64, tpu.core_type = #tpu.core_type<tc>, window_params = [{transform_indices = @transform_0, window_bounds = array<i64: 8, 32>}, {pipeline_mode = #tpu.pipeline_mode<synchronous>, transform_indices = @transform_1, window_bounds = array<i64: 1, 32>}, {pipeline_mode = #tpu.pipeline_mode<synchronous>, transform_indices = @transform_2, window_bounds = array<i64: 1, 32>}, {pipeline_mode = #tpu.pipeline_mode<synchronous>, transform_indices = @transform_3, window_bounds = array<i64: 32, 96>}, {pipeline_mode = #tpu.pipeline_mode<synchronous>, transform_indices = @transform_4, window_bounds = array<i64: 1, 96>}, {pipeline_mode = #tpu.pipeline_mode<synchronous>, transform_indices = @transform_5, window_bounds = array<i64: 32, 32>}, {pipeline_mode = #tpu.pipeline_mode<synchronous>, transform_indices = @transform_6, window_bounds = array<i64: 1, 32>}, {pipeline_mode = #tpu.pipeline_mode<synchronous>, transform_indices = @transform_7, window_bounds = array<i64: 1, 32>}, {pipeline_mode = #tpu.pipeline_mode<synchronous>, transform_indices = @transform_8, window_bounds = array<i64: 1, 32>}, {pipeline_mode = #tpu.pipeline_mode<synchronous>, transform_indices = @transform_9, window_bounds = array<i64: 32, 128>}, {pipeline_mode = #tpu.pipeline_mode<synchronous>, transform_indices = @transform_10, window_bounds = array<i64: 1, 128>}, {pipeline_mode = #tpu.pipeline_mode<synchronous>, transform_indices = @transform_11, window_bounds = array<i64: 128, 32>}, {pipeline_mode = #tpu.pipeline_mode<synchronous>, transform_indices = @transform_12, window_bounds = array<i64: 1, 32>}, {transform_indices = @transform_13, window_bounds = array<i64: 8, 32>}]} {
    %c0 = arith.constant 0 : index
    %c0_0 = arith.constant 0 : index
    %0 = vector.load %arg1[%c0, %c0_0] : memref<8x32xf32, #tpu.memory_space<vmem>>, vector<8x32xf32>
    %c0_1 = arith.constant 0 : index
    %c0_2 = arith.constant 0 : index
    %1 = vector.load %arg2[%c0_1, %c0_2] : memref<1x32xf32, #tpu.memory_space<vmem>>, vector<1x32xf32>
    %c0_3 = arith.constant 0 : index
    %c0_4 = arith.constant 0 : index
    %2 = vector.load %arg3[%c0_3, %c0_4] : memref<1x32xf32, #tpu.memory_space<vmem>>, vector<1x32xf32>
    %cst = arith.constant dense<0.000000e+00> : vector<8xf32>
    %3 = vector.multi_reduction <add>, %0, %cst [1] : vector<8x32xf32> to vector<8xf32>
    %4 = vector.shape_cast %3 : vector<8xf32> to vector<8x1xf32>
    %cst_5 = arith.constant 3.200000e+01 : f32
    %5 = vector.broadcast %cst_5 : f32 to vector<8x1xf32>
    %6 = arith.divf %4, %5 : vector<8x1xf32>
    %7 = vector.broadcast %6 : vector<8x1xf32> to vector<8x32xf32>
    %8 = arith.subf %0, %7 : vector<8x32xf32>
    %9 = arith.mulf %8, %8 : vector<8x32xf32>
    %cst_6 = arith.constant dense<0.000000e+00> : vector<8xf32>
    %10 = vector.multi_reduction <add>, %9, %cst_6 [1] : vector<8x32xf32> to vector<8xf32>
    %11 = vector.shape_cast %10 : vector<8xf32> to vector<8x1xf32>
    %cst_7 = arith.constant 3.200000e+01 : f32
    %12 = vector.broadcast %cst_7 : f32 to vector<8x1xf32>
    %13 = arith.divf %11, %12 : vector<8x1xf32>
    %14 = vector.broadcast %6 : vector<8x1xf32> to vector<8x32xf32>
    %15 = arith.subf %0, %14 : vector<8x32xf32>
    %cst_8 = arith.constant 9.99999974E-6 : f32
    %16 = vector.broadcast %cst_8 : f32 to vector<8x1xf32>
    %17 = arith.addf %13, %16 : vector<8x1xf32>
    %18 = math.rsqrt %17 : vector<8x1xf32>
    %19 = vector.broadcast %18 : vector<8x1xf32> to vector<8x32xf32>
    %20 = arith.mulf %15, %19 : vector<8x32xf32>
    %21 = vector.broadcast %1 : vector<1x32xf32> to vector<8x32xf32>
    %22 = arith.mulf %20, %21 : vector<8x32xf32>
    %23 = vector.broadcast %2 : vector<1x32xf32> to vector<8x32xf32>
    %24 = arith.addf %22, %23 : vector<8x32xf32>
    %c0_9 = arith.constant 0 : index
    %c0_10 = arith.constant 0 : index
    %25 = vector.load %arg4[%c0_9, %c0_10] : memref<32x96xf32, #tpu.memory_space<vmem>>, vector<32x96xf32>
    %cst_11 = arith.constant dense<0.000000e+00> : vector<8x96xf32>
    %26 = tpu.matmul %24, %25, %cst_11 {dimension_numbers = #tpu.dot_dimension_numbers<[1], [0], [0], [1], [0, 0, 1, 1], [], []>} : vector<8x32xf32>, vector<32x96xf32>, vector<8x96xf32> -> vector<8x96xf32>
    %c0_12 = arith.constant 0 : index
    %c0_13 = arith.constant 0 : index
    %27 = vector.load %arg5[%c0_12, %c0_13] : memref<1x96xf32, #tpu.memory_space<vmem>>, vector<1x96xf32>
    %28 = vector.broadcast %27 : vector<1x96xf32> to vector<8x96xf32>
    %29 = arith.addf %26, %28 : vector<8x96xf32>
    %30 = tpu.iota {dimensions = array<i32: 0>} : vector<8x8xi32>
    %31 = tpu.iota {dimensions = array<i32: 1>} : vector<8x8xi32>
    %32 = arith.cmpi sle, %31, %30 : vector<8x8xi32>
    %cst_14 = arith.constant 0.000000e+00 : f32
    %cst_15 = arith.constant -1.000000e+30 : f32
    %33 = vector.broadcast %cst_14 : f32 to vector<8x8xf32>
    %34 = vector.broadcast %cst_15 : f32 to vector<8x8xf32>
    %35 = arith.select %32, %33, %34 : vector<8x8xi1>, vector<8x8xf32>
    %cst_16 = arith.constant 0.000000e+00 : f32
    %36 = vector.broadcast %cst_16 : f32 to vector<8x32xf32>
    %cst_17 = arith.constant 0.000000e+00 : f32
    %37 = vector.broadcast %cst_17 : f32 to vector<8x32xf32>
    %38 = vector.extract_strided_slice %29 {offsets = [0, 0], sizes = [8, 8], strides = [1, 1]} : vector<8x96xf32> to vector<8x8xf32>
    %39 = vector.extract_strided_slice %29 {offsets = [0, 32], sizes = [8, 8], strides = [1, 1]} : vector<8x96xf32> to vector<8x8xf32>
    %40 = vector.extract_strided_slice %29 {offsets = [0, 64], sizes = [8, 8], strides = [1, 1]} : vector<8x96xf32> to vector<8x8xf32>
    %cst_18 = arith.constant dense<0.000000e+00> : vector<8x8xf32>
    %41 = tpu.matmul %38, %39, %cst_18 {dimension_numbers = #tpu.dot_dimension_numbers<[1], [1], [0], [0], [0, 0, 1, 0], [], []>} : vector<8x8xf32>, vector<8x8xf32>, vector<8x8xf32> -> vector<8x8xf32>
    %cst_19 = arith.constant 0.353553385 : f32
    %42 = vector.broadcast %cst_19 : f32 to vector<8x8xf32>
    %43 = arith.mulf %41, %42 : vector<8x8xf32>
    %44 = arith.addf %43, %35 : vector<8x8xf32>
    %cst_20 = arith.constant dense<0xFF800000> : vector<8xf32>
    %45 = vector.multi_reduction <maximumf>, %44, %cst_20 [1] : vector<8x8xf32> to vector<8xf32>
    %46 = vector.shape_cast %45 : vector<8xf32> to vector<8x1xf32>
    %47 = vector.broadcast %46 : vector<8x1xf32> to vector<8x8xf32>
    %48 = arith.subf %44, %47 : vector<8x8xf32>
    %49 = math.exp %48 : vector<8x8xf32>
    %cst_21 = arith.constant dense<0.000000e+00> : vector<8xf32>
    %50 = vector.multi_reduction <add>, %49, %cst_21 [1] : vector<8x8xf32> to vector<8xf32>
    %51 = vector.shape_cast %50 : vector<8xf32> to vector<8x1xf32>
    %52 = tpu.reciprocal %51 {approx = true} : vector<8x1xf32> -> vector<8x1xf32>
    %53 = vector.broadcast %52 : vector<8x1xf32> to vector<8x8xf32>
    %54 = arith.mulf %49, %53 : vector<8x8xf32>
    %cst_22 = arith.constant dense<0.000000e+00> : vector<8x8xf32>
    %55 = tpu.matmul %54, %40, %cst_22 {dimension_numbers = #tpu.dot_dimension_numbers<[1], [0], [0], [1], [0, 0, 1, 1], [], []>} : vector<8x8xf32>, vector<8x8xf32>, vector<8x8xf32> -> vector<8x8xf32>
    %c0_23 = arith.constant 0 : index
    %c0_24 = arith.constant 0 : index
    %56 = vector.load %arg6[%c0_23, %c0_24] : memref<32x32xf32, #tpu.memory_space<vmem>>, vector<8x32xf32>
    %cst_25 = arith.constant dense<0.000000e+00> : vector<8x32xf32>
    %57 = tpu.matmul %55, %56, %cst_25 {dimension_numbers = #tpu.dot_dimension_numbers<[1], [0], [0], [1], [0, 0, 1, 1], [], []>} : vector<8x8xf32>, vector<8x32xf32>, vector<8x32xf32> -> vector<8x32xf32>
    %58 = arith.addf %36, %57 : vector<8x32xf32>
    %59 = vector.extract_strided_slice %29 {offsets = [0, 8], sizes = [8, 8], strides = [1, 1]} : vector<8x96xf32> to vector<8x8xf32>
    %60 = vector.extract_strided_slice %29 {offsets = [0, 40], sizes = [8, 8], strides = [1, 1]} : vector<8x96xf32> to vector<8x8xf32>
    %61 = vector.extract_strided_slice %29 {offsets = [0, 72], sizes = [8, 8], strides = [1, 1]} : vector<8x96xf32> to vector<8x8xf32>
    %cst_26 = arith.constant dense<0.000000e+00> : vector<8x8xf32>
    %62 = tpu.matmul %59, %60, %cst_26 {dimension_numbers = #tpu.dot_dimension_numbers<[1], [1], [0], [0], [0, 0, 1, 0], [], []>} : vector<8x8xf32>, vector<8x8xf32>, vector<8x8xf32> -> vector<8x8xf32>
    %cst_27 = arith.constant 0.353553385 : f32
    %63 = vector.broadcast %cst_27 : f32 to vector<8x8xf32>
    %64 = arith.mulf %62, %63 : vector<8x8xf32>
    %65 = arith.addf %64, %35 : vector<8x8xf32>
    %cst_28 = arith.constant dense<0xFF800000> : vector<8xf32>
    %66 = vector.multi_reduction <maximumf>, %65, %cst_28 [1] : vector<8x8xf32> to vector<8xf32>
    %67 = vector.shape_cast %66 : vector<8xf32> to vector<8x1xf32>
    %68 = vector.broadcast %67 : vector<8x1xf32> to vector<8x8xf32>
    %69 = arith.subf %65, %68 : vector<8x8xf32>
    %70 = math.exp %69 : vector<8x8xf32>
    %cst_29 = arith.constant dense<0.000000e+00> : vector<8xf32>
    %71 = vector.multi_reduction <add>, %70, %cst_29 [1] : vector<8x8xf32> to vector<8xf32>
    %72 = vector.shape_cast %71 : vector<8xf32> to vector<8x1xf32>
    %73 = tpu.reciprocal %72 {approx = true} : vector<8x1xf32> -> vector<8x1xf32>
    %74 = vector.broadcast %73 : vector<8x1xf32> to vector<8x8xf32>
    %75 = arith.mulf %70, %74 : vector<8x8xf32>
    %cst_30 = arith.constant dense<0.000000e+00> : vector<8x8xf32>
    %76 = tpu.matmul %75, %61, %cst_30 {dimension_numbers = #tpu.dot_dimension_numbers<[1], [0], [0], [1], [0, 0, 1, 1], [], []>} : vector<8x8xf32>, vector<8x8xf32>, vector<8x8xf32> -> vector<8x8xf32>
    %c8 = arith.constant 8 : index
    %c0_31 = arith.constant 0 : index
    %77 = vector.load %arg6[%c8, %c0_31] : memref<32x32xf32, #tpu.memory_space<vmem>>, vector<8x32xf32>
    %cst_32 = arith.constant dense<0.000000e+00> : vector<8x32xf32>
    %78 = tpu.matmul %76, %77, %cst_32 {dimension_numbers = #tpu.dot_dimension_numbers<[1], [0], [0], [1], [0, 0, 1, 1], [], []>} : vector<8x8xf32>, vector<8x32xf32>, vector<8x32xf32> -> vector<8x32xf32>
    %79 = arith.addf %37, %78 : vector<8x32xf32>
    %80 = vector.extract_strided_slice %29 {offsets = [0, 16], sizes = [8, 8], strides = [1, 1]} : vector<8x96xf32> to vector<8x8xf32>
    %81 = vector.extract_strided_slice %29 {offsets = [0, 48], sizes = [8, 8], strides = [1, 1]} : vector<8x96xf32> to vector<8x8xf32>
    %82 = vector.extract_strided_slice %29 {offsets = [0, 80], sizes = [8, 8], strides = [1, 1]} : vector<8x96xf32> to vector<8x8xf32>
    %cst_33 = arith.constant dense<0.000000e+00> : vector<8x8xf32>
    %83 = tpu.matmul %80, %81, %cst_33 {dimension_numbers = #tpu.dot_dimension_numbers<[1], [1], [0], [0], [0, 0, 1, 0], [], []>} : vector<8x8xf32>, vector<8x8xf32>, vector<8x8xf32> -> vector<8x8xf32>
    %cst_34 = arith.constant 0.353553385 : f32
    %84 = vector.broadcast %cst_34 : f32 to vector<8x8xf32>
    %85 = arith.mulf %83, %84 : vector<8x8xf32>
    %86 = arith.addf %85, %35 : vector<8x8xf32>
    %cst_35 = arith.constant dense<0xFF800000> : vector<8xf32>
    %87 = vector.multi_reduction <maximumf>, %86, %cst_35 [1] : vector<8x8xf32> to vector<8xf32>
    %88 = vector.shape_cast %87 : vector<8xf32> to vector<8x1xf32>
    %89 = vector.broadcast %88 : vector<8x1xf32> to vector<8x8xf32>
    %90 = arith.subf %86, %89 : vector<8x8xf32>
    %91 = math.exp %90 : vector<8x8xf32>
    %cst_36 = arith.constant dense<0.000000e+00> : vector<8xf32>
    %92 = vector.multi_reduction <add>, %91, %cst_36 [1] : vector<8x8xf32> to vector<8xf32>
    %93 = vector.shape_cast %92 : vector<8xf32> to vector<8x1xf32>
    %94 = tpu.reciprocal %93 {approx = true} : vector<8x1xf32> -> vector<8x1xf32>
    %95 = vector.broadcast %94 : vector<8x1xf32> to vector<8x8xf32>
    %96 = arith.mulf %91, %95 : vector<8x8xf32>
    %cst_37 = arith.constant dense<0.000000e+00> : vector<8x8xf32>
    %97 = tpu.matmul %96, %82, %cst_37 {dimension_numbers = #tpu.dot_dimension_numbers<[1], [0], [0], [1], [0, 0, 1, 1], [], []>} : vector<8x8xf32>, vector<8x8xf32>, vector<8x8xf32> -> vector<8x8xf32>
    %c16 = arith.constant 16 : index
    %c0_38 = arith.constant 0 : index
    %98 = vector.load %arg6[%c16, %c0_38] : memref<32x32xf32, #tpu.memory_space<vmem>>, vector<8x32xf32>
    %cst_39 = arith.constant dense<0.000000e+00> : vector<8x32xf32>
    %99 = tpu.matmul %97, %98, %cst_39 {dimension_numbers = #tpu.dot_dimension_numbers<[1], [0], [0], [1], [0, 0, 1, 1], [], []>} : vector<8x8xf32>, vector<8x32xf32>, vector<8x32xf32> -> vector<8x32xf32>
    %100 = arith.addf %58, %99 : vector<8x32xf32>
    %101 = vector.extract_strided_slice %29 {offsets = [0, 24], sizes = [8, 8], strides = [1, 1]} : vector<8x96xf32> to vector<8x8xf32>
    %102 = vector.extract_strided_slice %29 {offsets = [0, 56], sizes = [8, 8], strides = [1, 1]} : vector<8x96xf32> to vector<8x8xf32>
    %103 = vector.extract_strided_slice %29 {offsets = [0, 88], sizes = [8, 8], strides = [1, 1]} : vector<8x96xf32> to vector<8x8xf32>
    %cst_40 = arith.constant dense<0.000000e+00> : vector<8x8xf32>
    %104 = tpu.matmul %101, %102, %cst_40 {dimension_numbers = #tpu.dot_dimension_numbers<[1], [1], [0], [0], [0, 0, 1, 0], [], []>} : vector<8x8xf32>, vector<8x8xf32>, vector<8x8xf32> -> vector<8x8xf32>
    %cst_41 = arith.constant 0.353553385 : f32
    %105 = vector.broadcast %cst_41 : f32 to vector<8x8xf32>
    %106 = arith.mulf %104, %105 : vector<8x8xf32>
    %107 = arith.addf %106, %35 : vector<8x8xf32>
    %cst_42 = arith.constant dense<0xFF800000> : vector<8xf32>
    %108 = vector.multi_reduction <maximumf>, %107, %cst_42 [1] : vector<8x8xf32> to vector<8xf32>
    %109 = vector.shape_cast %108 : vector<8xf32> to vector<8x1xf32>
    %110 = vector.broadcast %109 : vector<8x1xf32> to vector<8x8xf32>
    %111 = arith.subf %107, %110 : vector<8x8xf32>
    %112 = math.exp %111 : vector<8x8xf32>
    %cst_43 = arith.constant dense<0.000000e+00> : vector<8xf32>
    %113 = vector.multi_reduction <add>, %112, %cst_43 [1] : vector<8x8xf32> to vector<8xf32>
    %114 = vector.shape_cast %113 : vector<8xf32> to vector<8x1xf32>
    %115 = tpu.reciprocal %114 {approx = true} : vector<8x1xf32> -> vector<8x1xf32>
    %116 = vector.broadcast %115 : vector<8x1xf32> to vector<8x8xf32>
    %117 = arith.mulf %112, %116 : vector<8x8xf32>
    %cst_44 = arith.constant dense<0.000000e+00> : vector<8x8xf32>
    %118 = tpu.matmul %117, %103, %cst_44 {dimension_numbers = #tpu.dot_dimension_numbers<[1], [0], [0], [1], [0, 0, 1, 1], [], []>} : vector<8x8xf32>, vector<8x8xf32>, vector<8x8xf32> -> vector<8x8xf32>
    %c24 = arith.constant 24 : index
    %c0_45 = arith.constant 0 : index
    %119 = vector.load %arg6[%c24, %c0_45] : memref<32x32xf32, #tpu.memory_space<vmem>>, vector<8x32xf32>
    %cst_46 = arith.constant dense<0.000000e+00> : vector<8x32xf32>
    %120 = tpu.matmul %118, %119, %cst_46 {dimension_numbers = #tpu.dot_dimension_numbers<[1], [0], [0], [1], [0, 0, 1, 1], [], []>} : vector<8x8xf32>, vector<8x32xf32>, vector<8x32xf32> -> vector<8x32xf32>
    %121 = arith.addf %79, %120 : vector<8x32xf32>
    %122 = arith.addf %100, %121 : vector<8x32xf32>
    %123 = arith.addf %0, %122 : vector<8x32xf32>
    %c0_47 = arith.constant 0 : index
    %c0_48 = arith.constant 0 : index
    %124 = vector.load %arg7[%c0_47, %c0_48] : memref<1x32xf32, #tpu.memory_space<vmem>>, vector<1x32xf32>
    %125 = vector.broadcast %124 : vector<1x32xf32> to vector<8x32xf32>
    %126 = arith.addf %123, %125 : vector<8x32xf32>
    %c0_49 = arith.constant 0 : index
    %c0_50 = arith.constant 0 : index
    %127 = vector.load %arg8[%c0_49, %c0_50] : memref<1x32xf32, #tpu.memory_space<vmem>>, vector<1x32xf32>
    %c0_51 = arith.constant 0 : index
    %c0_52 = arith.constant 0 : index
    %128 = vector.load %arg9[%c0_51, %c0_52] : memref<1x32xf32, #tpu.memory_space<vmem>>, vector<1x32xf32>
    %cst_53 = arith.constant dense<0.000000e+00> : vector<8xf32>
    %129 = vector.multi_reduction <add>, %126, %cst_53 [1] : vector<8x32xf32> to vector<8xf32>
    %130 = vector.shape_cast %129 : vector<8xf32> to vector<8x1xf32>
    %cst_54 = arith.constant 3.200000e+01 : f32
    %131 = vector.broadcast %cst_54 : f32 to vector<8x1xf32>
    %132 = arith.divf %130, %131 : vector<8x1xf32>
    %133 = vector.broadcast %132 : vector<8x1xf32> to vector<8x32xf32>
    %134 = arith.subf %126, %133 : vector<8x32xf32>
    %135 = arith.mulf %134, %134 : vector<8x32xf32>
    %cst_55 = arith.constant dense<0.000000e+00> : vector<8xf32>
    %136 = vector.multi_reduction <add>, %135, %cst_55 [1] : vector<8x32xf32> to vector<8xf32>
    %137 = vector.shape_cast %136 : vector<8xf32> to vector<8x1xf32>
    %cst_56 = arith.constant 3.200000e+01 : f32
    %138 = vector.broadcast %cst_56 : f32 to vector<8x1xf32>
    %139 = arith.divf %137, %138 : vector<8x1xf32>
    %140 = vector.broadcast %132 : vector<8x1xf32> to vector<8x32xf32>
    %141 = arith.subf %126, %140 : vector<8x32xf32>
    %cst_57 = arith.constant 9.99999974E-6 : f32
    %142 = vector.broadcast %cst_57 : f32 to vector<8x1xf32>
    %143 = arith.addf %139, %142 : vector<8x1xf32>
    %144 = math.rsqrt %143 : vector<8x1xf32>
    %145 = vector.broadcast %144 : vector<8x1xf32> to vector<8x32xf32>
    %146 = arith.mulf %141, %145 : vector<8x32xf32>
    %147 = vector.broadcast %127 : vector<1x32xf32> to vector<8x32xf32>
    %148 = arith.mulf %146, %147 : vector<8x32xf32>
    %149 = vector.broadcast %128 : vector<1x32xf32> to vector<8x32xf32>
    %150 = arith.addf %148, %149 : vector<8x32xf32>
    %c0_58 = arith.constant 0 : index
    %c0_59 = arith.constant 0 : index
    %151 = vector.load %arg10[%c0_58, %c0_59] : memref<32x128xf32, #tpu.memory_space<vmem>>, vector<32x128xf32>
    %cst_60 = arith.constant dense<0.000000e+00> : vector<8x128xf32>
    %152 = tpu.matmul %150, %151, %cst_60 {dimension_numbers = #tpu.dot_dimension_numbers<[1], [0], [0], [1], [0, 0, 1, 1], [], []>} : vector<8x32xf32>, vector<32x128xf32>, vector<8x128xf32> -> vector<8x128xf32>
    %c0_61 = arith.constant 0 : index
    %c0_62 = arith.constant 0 : index
    %153 = vector.load %arg11[%c0_61, %c0_62] : memref<1x128xf32, #tpu.memory_space<vmem>>, vector<1x128xf32>
    %154 = vector.broadcast %153 : vector<1x128xf32> to vector<8x128xf32>
    %155 = arith.addf %152, %154 : vector<8x128xf32>
    %cst_63 = arith.constant 5.000000e-01 : f32
    %156 = vector.broadcast %cst_63 : f32 to vector<8x128xf32>
    %157 = arith.mulf %156, %155 : vector<8x128xf32>
    %cst_64 = arith.constant 4.471500e-02 : f32
    %158 = vector.broadcast %cst_64 : f32 to vector<8x128xf32>
    %159 = arith.mulf %158, %155 : vector<8x128xf32>
    %160 = arith.mulf %159, %155 : vector<8x128xf32>
    %161 = arith.mulf %160, %155 : vector<8x128xf32>
    %162 = arith.addf %155, %161 : vector<8x128xf32>
    %cst_65 = arith.constant 0.797884583 : f32
    %163 = vector.broadcast %cst_65 : f32 to vector<8x128xf32>
    %164 = arith.mulf %163, %162 : vector<8x128xf32>
    %165 = math.tanh %164 : vector<8x128xf32>
    %cst_66 = arith.constant 1.000000e+00 : f32
    %166 = vector.broadcast %cst_66 : f32 to vector<8x128xf32>
    %167 = arith.addf %166, %165 : vector<8x128xf32>
    %168 = arith.mulf %157, %167 : vector<8x128xf32>
    %c0_67 = arith.constant 0 : index
    %c0_68 = arith.constant 0 : index
    %169 = vector.load %arg12[%c0_67, %c0_68] : memref<128x32xf32, #tpu.memory_space<vmem>>, vector<128x32xf32>
    %cst_69 = arith.constant dense<0.000000e+00> : vector<8x32xf32>
    %170 = tpu.matmul %168, %169, %cst_69 {dimension_numbers = #tpu.dot_dimension_numbers<[1], [0], [0], [1], [0, 0, 1, 1], [], []>} : vector<8x128xf32>, vector<128x32xf32>, vector<8x32xf32> -> vector<8x32xf32>
    %c0_70 = arith.constant 0 : index
    %c0_71 = arith.constant 0 : index
    %171 = vector.load %arg13[%c0_70, %c0_71] : memref<1x32xf32, #tpu.memory_space<vmem>>, vector<1x32xf32>
    %172 = vector.broadcast %171 : vector<1x32xf32> to vector<8x32xf32>
    %173 = arith.addf %170, %172 : vector<8x32xf32>
    %174 = arith.addf %126, %173 : vector<8x32xf32>
    %c0_72 = arith.constant 0 : index
    %c0_73 = arith.constant 0 : index
    %175 = vector.load %arg14[%c0_72, %c0_73] : memref<8x32xf32, #tpu.memory_space<vmem>>, vector<8x32xf32>
    tpu.vector_store %arg14[%c0_72, %c0_73], %174 {strides = array<i32>} : memref<8x32xf32, #tpu.memory_space<vmem>>, vector<8x32xf32>,
    return
  }
  func.func @transform_0(%arg0: i32) -> (i32, i32) {
    %c0_i32 = arith.constant 0 : i32
    %c0_i32_0 = arith.constant 0 : i32
    return %arg0, %c0_i32 : i32, i32
  }
  func.func @transform_1(%arg0: i32) -> (i32, i32) {
    %c0_i32 = arith.constant 0 : i32
    %c0_i32_0 = arith.constant 0 : i32
    %c0_i32_1 = arith.constant 0 : i32
    return %c0_i32, %c0_i32_0 : i32, i32
  }
  func.func @transform_2(%arg0: i32) -> (i32, i32) {
    %c0_i32 = arith.constant 0 : i32
    %c0_i32_0 = arith.constant 0 : i32
    %c0_i32_1 = arith.constant 0 : i32
    return %c0_i32, %c0_i32_0 : i32, i32
  }
  func.func @transform_3(%arg0: i32) -> (i32, i32) {
    %c0_i32 = arith.constant 0 : i32
    %c0_i32_0 = arith.constant 0 : i32
    %c0_i32_1 = arith.constant 0 : i32
    return %c0_i32, %c0_i32_0 : i32, i32
  }
  func.func @transform_4(%arg0: i32) -> (i32, i32) {
    %c0_i32 = arith.constant 0 : i32
    %c0_i32_0 = arith.constant 0 : i32
    %c0_i32_1 = arith.constant 0 : i32
    return %c0_i32, %c0_i32_0 : i32, i32
  }
  func.func @transform_5(%arg0: i32) -> (i32, i32) {
    %c0_i32 = arith.constant 0 : i32
    %c0_i32_0 = arith.constant 0 : i32
    %c0_i32_1 = arith.constant 0 : i32
    return %c0_i32, %c0_i32_0 : i32, i32
  }
  func.func @transform_6(%arg0: i32) -> (i32, i32) {
    %c0_i32 = arith.constant 0 : i32
    %c0_i32_0 = arith.constant 0 : i32
    %c0_i32_1 = arith.constant 0 : i32
    return %c0_i32, %c0_i32_0 : i32, i32
  }
  func.func @transform_7(%arg0: i32) -> (i32, i32) {
    %c0_i32 = arith.constant 0 : i32
    %c0_i32_0 = arith.constant 0 : i32
    %c0_i32_1 = arith.constant 0 : i32
    return %c0_i32, %c0_i32_0 : i32, i32
  }
  func.func @transform_8(%arg0: i32) -> (i32, i32) {
    %c0_i32 = arith.constant 0 : i32
    %c0_i32_0 = arith.constant 0 : i32
    %c0_i32_1 = arith.constant 0 : i32
    return %c0_i32, %c0_i32_0 : i32, i32
  }
  func.func @transform_9(%arg0: i32) -> (i32, i32) {
    %c0_i32 = arith.constant 0 : i32
    %c0_i32_0 = arith.constant 0 : i32
    %c0_i32_1 = arith.constant 0 : i32
    return %c0_i32, %c0_i32_0 : i32, i32
  }
  func.func @transform_10(%arg0: i32) -> (i32, i32) {
    %c0_i32 = arith.constant 0 : i32
    %c0_i32_0 = arith.constant 0 : i32
    %c0_i32_1 = arith.constant 0 : i32
    return %c0_i32, %c0_i32_0 : i32, i32
  }
  func.func @transform_11(%arg0: i32) -> (i32, i32) {
    %c0_i32 = arith.constant 0 : i32
    %c0_i32_0 = arith.constant 0 : i32
    %c0_i32_1 = arith.constant 0 : i32
    return %c0_i32, %c0_i32_0 : i32, i32
  }
  func.func @transform_12(%arg0: i32) -> (i32, i32) {
    %c0_i32 = arith.constant 0 : i32
    %c0_i32_0 = arith.constant 0 : i32
    %c0_i32_1 = arith.constant 0 : i32
    return %c0_i32, %c0_i32_0 : i32, i32
  }
  func.func @transform_13(%arg0: i32) -> (i32, i32) {
    %c0_i32 = arith.constant 0 : i32
    %c0_i32_0 = arith.constant 0 : i32
    return %arg0, %c0_i32 : i32, i32
  }
}

</mosaic_0001>

<llo_original>
// kernel: tpu_custom_call.1
$region0: #{tpu_custom_call.1}
  #allocation0 [shape = 'u32[]', space=smem, size = 0x4, offset = 0x4, fixed_abs, tag = 'smem constant byte address 0x4 - core index']
  #allocation1 [shape = 'u32[72,128]{1,0:T(1,128)}', space=vmem, size = 0x9000, scoped, tag = 'internal scratch']
  %s0 = inlined_call_operand.vmem [shape: f32[16,32], index: 0, kind: input, shape index: {}]
  %s1 = inlined_call_operand.vmem [shape: f32[1,32], index: 1, kind: input, shape index: {}]
  %s2 = inlined_call_operand.vmem [shape: f32[1,32], index: 2, kind: input, shape index: {}]
  %s3 = inlined_call_operand.vmem [shape: f32[32,96], index: 3, kind: input, shape index: {}]
  %s4 = inlined_call_operand.vmem [shape: f32[1,96], index: 4, kind: input, shape index: {}]
  %s5 = inlined_call_operand.vmem [shape: f32[32,32], index: 5, kind: input, shape index: {}]
  %s6 = inlined_call_operand.vmem [shape: f32[1,32], index: 6, kind: input, shape index: {}]
  %s7 = inlined_call_operand.vmem [shape: f32[1,32], index: 7, kind: input, shape index: {}]
  %s8 = inlined_call_operand.vmem [shape: f32[1,32], index: 8, kind: input, shape index: {}]
  %s9 = inlined_call_operand.vmem [shape: f32[32,128], index: 9, kind: input, shape index: {}]
  %s10 = inlined_call_operand.vmem [shape: f32[1,128], index: 10, kind: input, shape index: {}]
  %s11 = inlined_call_operand.vmem [shape: f32[128,32], index: 11, kind: input, shape index: {}]
  %s12 = inlined_call_operand.vmem [shape: f32[1,32], index: 12, kind: input, shape index: {}]
  %s13 = inlined_call_operand.hbm [shape: f32[16,32], index: 13, kind: output, shape index: {}]
  %s14 = sld [smem:[#allocation0]]
  $region85: #{tpu_custom_call.1} parent=0
    _
  %s16 = ssub.s32 1, %s14
  %s17 = scalar_select 0, %s16, %s14
  $region1: #{tpu_custom_call.1} parent=0
    #allocation2 [shape = 'u8[8192]{0}', space=vmem, size = 0x2000, scoped, tag = 'output window, operand 0']
    #allocation3 [shape = 's32[2]{0}', space=sflag, size = 0x8, scoped, tag = 'scoped memory for tpu_custom_call.1']
    %18 = vsyncpa [#allocation3], 0
    %s19 = scalar_lea.sflag [#allocation3], 1
    %20 = vsyncpa %s19, 0
    loop: start=0, step=1, limit=4
    $region2: #{tpu_custom_call.1} parent=1 // loop_pre_header
      _
    $region3: #{tpu_custom_call.1} parent=1 // loop_header
      %s22 = sphi 0, %s26
      %p23 = scmp.ge.s32.totalorder %s22, 4
      %s32 = sphi 0, %s34
      %s35 = sphi 0, %s32
      %s36 = sphi 0, %s35
      %s52 = sphi 0, %s36
      %s56 = sphi 0, %s56
      %s58 = sphi 0, %s56
      %s59 = sphi 0, %s58
      %s73 = sphi 0, %s59
      %s77 = sphi 0, %s77
      %s79 = sphi 0, %s77
      %s80 = sphi 0, %s79
      %s94 = sphi 0, %s80
      %s98 = sphi 0, %s98
      %s100 = sphi 0, %s98
      %s101 = sphi 0, %s100
      %s115 = sphi 0, %s101
      %s119 = sphi 0, %s119
      %s121 = sphi 0, %s119
      %s122 = sphi 0, %s121
      %s136 = sphi 0, %s122
      %s140 = sphi 0, %s140
      %s142 = sphi 0, %s140
      %s143 = sphi 0, %s142
      %s157 = sphi 0, %s143
      %s161 = sphi 0, %s161
      %s163 = sphi 0, %s161
      %s164 = sphi 0, %s163
      %s178 = sphi 0, %s164
      %s182 = sphi 0, %s182
      %s184 = sphi 0, %s182
      %s185 = sphi 0, %s184
      %s199 = sphi 0, %s185
      %s203 = sphi 0, %s203
      %s205 = sphi 0, %s203
      %s206 = sphi 0, %s205
      %s220 = sphi 0, %s206
      %s224 = sphi 0, %s224
      %s226 = sphi 0, %s224
      %s227 = sphi 0, %s226
      %s241 = sphi 0, %s227
      %s245 = sphi 0, %s245
      %s247 = sphi 0, %s245
      %s248 = sphi 0, %s247
      %s262 = sphi 0, %s248
      %s266 = sphi 0, %s266
      %s268 = sphi 0, %s266
      %s269 = sphi 0, %s268
      %s283 = sphi 0, %s269
      %s287 = sphi 0, %s287
      %s289 = sphi 0, %s287
      %s290 = sphi 0, %s289
      %s304 = sphi 0, %s290
      %s310 = sphi 0, %s312
      %s313 = sphi 0, %s310
      %s314 = sphi 0, %s313
      %s330 = sphi 0, %s314
    $region4: #{tpu_custom_call.1} parent=1 // loop_header_branch
      %25 = sbr.rel (%p23) target = $region8
    $region5: #{tpu_custom_call.1} parent=1 // loop_body
      %s27 = ssub.s32 %s22, 1
      %s28 = ssub.s32 %s22, 2
      %s29 = sadd.s32 %s22, 1
      %s30 = ssub.s32 %s22, %s29
      %p31 = scmp.eq.s32.totalorder %s30, 0
      %s33 = sadd.s32 %s32, 1
      %s34 = scalar_select %p31, %s32, %s33
      %p37 = pneg %p31
      %p38 = scmp.eq.s32.totalorder %s22, 1
      %p39 = por %p37, %p38
      %p40 = scmp.ne.s32.totalorder %s32, %s35
      %p41 = scmp.eq.s32.totalorder %s22, 0
      %p42 = por %p40, %p41
      %p43 = scmp.ne.s32.totalorder %s32, %s35
      %p44 = scmp.eq.s32.totalorder %s27, 1
      %p45 = por %p43, %p44
      %p46 = scmp.ne.s32.totalorder %s35, %s36
      %p47 = scmp.eq.s32.totalorder %s27, 0
      %p48 = por %p46, %p47
      %p49 = scmp.ne.s32.totalorder %s35, %s36
      %p50 = scmp.eq.s32.totalorder %s28, 1
      %p51 = por %p49, %p50
      %p53 = scmp.ne.s32.totalorder %s36, %s52
      %p54 = scmp.eq.s32.totalorder %s28, 0
      %p55 = por %p53, %p54
      %s57 = sadd.s32 %s56, 1
      %p60 = scmp.eq.s32.totalorder %s22, 1
      %p61 = scmp.ne.s32.totalorder %s56, %s58
      %p62 = scmp.eq.s32.totalorder %s22, 0
      %p63 = por %p61, %p62
      %p64 = scmp.ne.s32.totalorder %s56, %s58
      %p65 = scmp.eq.s32.totalorder %s27, 1
      %p66 = por %p64, %p65
      %p67 = scmp.ne.s32.totalorder %s58, %s59
      %p68 = scmp.eq.s32.totalorder %s27, 0
      %p69 = por %p67, %p68
      %p70 = scmp.ne.s32.totalorder %s58, %s59
      %p71 = scmp.eq.s32.totalorder %s28, 1
      %p72 = por %p70, %p71
      %p74 = scmp.ne.s32.totalorder %s59, %s73
      %p75 = scmp.eq.s32.totalorder %s28, 0
      %p76 = por %p74, %p75
      %s78 = sadd.s32 %s77, 1
      %p81 = scmp.eq.s32.totalorder %s22, 1
      %p82 = scmp.ne.s32.totalorder %s77, %s79
      %p83 = scmp.eq.s32.totalorder %s22, 0
      %p84 = por %p82, %p83
      %p85 = scmp.ne.s32.totalorder %s77, %s79
      %p86 = scmp.eq.s32.totalorder %s27, 1
      %p87 = por %p85, %p86
      %p88 = scmp.ne.s32.totalorder %s79, %s80
      %p89 = scmp.eq.s32.totalorder %s27, 0
      %p90 = por %p88, %p89
      %p91 = scmp.ne.s32.totalorder %s79, %s80
      %p92 = scmp.eq.s32.totalorder %s28, 1
      %p93 = por %p91, %p92
      %p95 = scmp.ne.s32.totalorder %s80, %s94
      %p96 = scmp.eq.s32.totalorder %s28, 0
      %p97 = por %p95, %p96
      %s99 = sadd.s32 %s98, 1
      %p102 = scmp.eq.s32.totalorder %s22, 1
      %p103 = scmp.ne.s32.totalorder %s98, %s100
      %p104 = scmp.eq.s32.totalorder %s22, 0
      %p105 = por %p103, %p104
      %p106 = scmp.ne.s32.totalorder %s98, %s100
      %p107 = scmp.eq.s32.totalorder %s27, 1
      %p108 = por %p106, %p107
      %p109 = scmp.ne.s32.totalorder %s100, %s101
      %p110 = scmp.eq.s32.totalorder %s27, 0
      %p111 = por %p109, %p110
      %p112 = scmp.ne.s32.totalorder %s100, %s101
      %p113 = scmp.eq.s32.totalorder %s28, 1
      %p114 = por %p112, %p113
      %p116 = scmp.ne.s32.totalorder %s101, %s115
      %p117 = scmp.eq.s32.totalorder %s28, 0
      %p118 = por %p116, %p117
      %s120 = sadd.s32 %s119, 1
      %p123 = scmp.eq.s32.totalorder %s22, 1
      %p124 = scmp.ne.s32.totalorder %s119, %s121
      %p125 = scmp.eq.s32.totalorder %s22, 0
      %p126 = por %p124, %p125
      %p127 = scmp.ne.s32.totalorder %s119, %s121
      %p128 = scmp.eq.s32.totalorder %s27, 1
      %p129 = por %p127, %p128
      %p130 = scmp.ne.s32.totalorder %s121, %s122
      %p131 = scmp.eq.s32.totalorder %s27, 0
      %p132 = por %p130, %p131
      %p133 = scmp.ne.s32.totalorder %s121, %s122
      %p134 = scmp.eq.s32.totalorder %s28, 1
      %p135 = por %p133, %p134
      %p137 = scmp.ne.s32.totalorder %s122, %s136
      %p138 = scmp.eq.s32.totalorder %s28, 0
      %p139 = por %p137, %p138
      %s141 = sadd.s32 %s140, 1
      %p144 = scmp.eq.s32.totalorder %s22, 1
      %p145 = scmp.ne.s32.totalorder %s140, %s142
      %p146 = scmp.eq.s32.totalorder %s22, 0
      %p147 = por %p145, %p146
      %p148 = scmp.ne.s32.totalorder %s140, %s142
      %p149 = scmp.eq.s32.totalorder %s27, 1
      %p150 = por %p148, %p149
      %p151 = scmp.ne.s32.totalorder %s142, %s143
      %p152 = scmp.eq.s32.totalorder %s27, 0
      %p153 = por %p151, %p152
      %p154 = scmp.ne.s32.totalorder %s142, %s143
      %p155 = scmp.eq.s32.totalorder %s28, 1
      %p156 = por %p154, %p155
      %p158 = scmp.ne.s32.totalorder %s143, %s157
      %p159 = scmp.eq.s32.totalorder %s28, 0
      %p160 = por %p158, %p159
      %s162 = sadd.s32 %s161, 1
      %p165 = scmp.eq.s32.totalorder %s22, 1
      %p166 = scmp.ne.s32.totalorder %s161, %s163
      %p167 = scmp.eq.s32.totalorder %s22, 0
      %p168 = por %p166, %p167
      %p169 = scmp.ne.s32.totalorder %s161, %s163
      %p170 = scmp.eq.s32.totalorder %s27, 1
      %p171 = por %p169, %p170
      %p172 = scmp.ne.s32.totalorder %s163, %s164
      %p173 = scmp.eq.s32.totalorder %s27, 0
      %p174 = por %p172, %p173
      %p175 = scmp.ne.s32.totalorder %s163, %s164
      %p176 = scmp.eq.s32.totalorder %s28, 1
      %p177 = por %p175, %p176
      %p179 = scmp.ne.s32.totalorder %s164, %s178
      %p180 = scmp.eq.s32.totalorder %s28, 0
      %p181 = por %p179, %p180
      %s183 = sadd.s32 %s182, 1
      %p186 = scmp.eq.s32.totalorder %s22, 1
      %p187 = scmp.ne.s32.totalorder %s182, %s184
      %p188 = scmp.eq.s32.totalorder %s22, 0
      %p189 = por %p187, %p188
      %p190 = scmp.ne.s32.totalorder %s182, %s184
      %p191 = scmp.eq.s32.totalorder %s27, 1
      %p192 = por %p190, %p191
      %p193 = scmp.ne.s32.totalorder %s184, %s185
      %p194 = scmp.eq.s32.totalorder %s27, 0
      %p195 = por %p193, %p194
      %p196 = scmp.ne.s32.totalorder %s184, %s185
      %p197 = scmp.eq.s32.totalorder %s28, 1
      %p198 = por %p196, %p197
      %p200 = scmp.ne.s32.totalorder %s185, %s199
      %p201 = scmp.eq.s32.totalorder %s28, 0
      %p202 = por %p200, %p201
      %s204 = sadd.s32 %s203, 1
      %p207 = scmp.eq.s32.totalorder %s22, 1
      %p208 = scmp.ne.s32.totalorder %s203, %s205
      %p209 = scmp.eq.s32.totalorder %s22, 0
      %p210 = por %p208, %p209
      %p211 = scmp.ne.s32.totalorder %s203, %s205
      %p212 = scmp.eq.s32.totalorder %s27, 1
      %p213 = por %p211, %p212
      %p214 = scmp.ne.s32.totalorder %s205, %s206
      %p215 = scmp.eq.s32.totalorder %s27, 0
      %p216 = por %p214, %p215
      %p217 = scmp.ne.s32.totalorder %s205, %s206
      %p218 = scmp.eq.s32.totalorder %s28, 1
      %p219 = por %p217, %p218
      %p221 = scmp.ne.s32.totalorder %s206, %s220
      %p222 = scmp.eq.s32.totalorder %s28, 0
      %p223 = por %p221, %p222
      %s225 = sadd.s32 %s224, 1
      %p228 = scmp.eq.s32.totalorder %s22, 1
      %p229 = scmp.ne.s32.totalorder %s224, %s226
      %p230 = scmp.eq.s32.totalorder %s22, 0
      %p231 = por %p229, %p230
      %p232 = scmp.ne.s32.totalorder %s224, %s226
      %p233 = scmp.eq.s32.totalorder %s27, 1
      %p234 = por %p232, %p233
      %p235 = scmp.ne.s32.totalorder %s226, %s227
      %p236 = scmp.eq.s32.totalorder %s27, 0
      %p237 = por %p235, %p236
      %p238 = scmp.ne.s32.totalorder %s226, %s227
      %p239 = scmp.eq.s32.totalorder %s28, 1
      %p240 = por %p238, %p239
      %p242 = scmp.ne.s32.totalorder %s227, %s241
      %p243 = scmp.eq.s32.totalorder %s28, 0
      %p244 = por %p242, %p243
      %s246 = sadd.s32 %s245, 1
      %p249 = scmp.eq.s32.totalorder %s22, 1
      %p250 = scmp.ne.s32.totalorder %s245, %s247
      %p251 = scmp.eq.s32.totalorder %s22, 0
      %p252 = por %p250, %p251
      %p253 = scmp.ne.s32.totalorder %s245, %s247
      %p254 = scmp.eq.s32.totalorder %s27, 1
      %p255 = por %p253, %p254
      %p256 = scmp.ne.s32.totalorder %s247, %s248
      %p257 = scmp.eq.s32.totalorder %s27, 0
      %p258 = por %p256, %p257
      %p259 = scmp.ne.s32.totalorder %s247, %s248
      %p260 = scmp.eq.s32.totalorder %s28, 1
      %p261 = por %p259, %p260
      %p263 = scmp.ne.s32.totalorder %s248, %s262
      %p264 = scmp.eq.s32.totalorder %s28, 0
      %p265 = por %p263, %p264
      %s267 = sadd.s32 %s266, 1
      %p270 = scmp.eq.s32.totalorder %s22, 1
      %p271 = scmp.ne.s32.totalorder %s266, %s268
      %p272 = scmp.eq.s32.totalorder %s22, 0
      %p273 = por %p271, %p272
      %p274 = scmp.ne.s32.totalorder %s266, %s268
      %p275 = scmp.eq.s32.totalorder %s27, 1
      %p276 = por %p274, %p275
      %p277 = scmp.ne.s32.totalorder %s268, %s269
      %p278 = scmp.eq.s32.totalorder %s27, 0
      %p279 = por %p277, %p278
      %p280 = scmp.ne.s32.totalorder %s268, %s269
      %p281 = scmp.eq.s32.totalorder %s28, 1
      %p282 = por %p280, %p281
      %p284 = scmp.ne.s32.totalorder %s269, %s283
      %p285 = scmp.eq.s32.totalorder %s28, 0
      %p286 = por %p284, %p285
      %s288 = sadd.s32 %s287, 1
      %p291 = scmp.eq.s32.totalorder %s22, 1
      %p292 = scmp.ne.s32.totalorder %s287, %s289
      %p293 = scmp.eq.s32.totalorder %s22, 0
      %p294 = por %p292, %p293
      %p295 = scmp.ne.s32.totalorder %s287, %s289
      %p296 = scmp.eq.s32.totalorder %s27, 1
      %p297 = por %p295, %p296
      %p298 = scmp.ne.s32.totalorder %s289, %s290
      %p299 = scmp.eq.s32.totalorder %s27, 0
      %p300 = por %p298, %p299
      %p301 = scmp.ne.s32.totalorder %s289, %s290
      %p302 = scmp.eq.s32.totalorder %s28, 1
      %p303 = por %p301, %p302
      %p305 = scmp.ne.s32.totalorder %s290, %s304
      %p306 = scmp.eq.s32.totalorder %s28, 0
      %p307 = por %p305, %p306
      %s308 = ssub.s32 %s22, %s29
      %p309 = scmp.eq.s32.totalorder %s308, 0
      %s311 = sadd.s32 %s310, 1
      %s312 = scalar_select %p309, %s310, %s311
      %p315 = pneg %p309
      %p316 = scmp.eq.s32.totalorder %s22, 1
      %p317 = por %p315, %p316
      %p318 = scmp.ne.s32.totalorder %s310, %s313
      %p319 = scmp.eq.s32.totalorder %s22, 0
      %p320 = por %p318, %p319
      %p321 = scmp.ne.s32.totalorder %s310, %s313
      %p322 = scmp.eq.s32.totalorder %s27, 1
      %p323 = por %p321, %p322
      %p324 = scmp.ne.s32.totalorder %s313, %s314
      %p325 = scmp.eq.s32.totalorder %s27, 0
      %p326 = por %p324, %p325
      %p327 = scmp.ne.s32.totalorder %s313, %s314
      %p328 = scmp.eq.s32.totalorder %s28, 1
      %p329 = por %p327, %p328
      %p331 = scmp.ne.s32.totalorder %s314, %s330
      %p332 = scmp.eq.s32.totalorder %s28, 0
      %p333 = por %p331, %p332
      %p334 = scmp.le.s32.totalorder 1, %s22
      %p335 = scmp.lt.s32.totalorder %s22, 3
      %p336 = pnand %p334, %p335
      %p337 = pneg %p336
      // Predicated region
      $region9: #{tpu_custom_call.1} parent=5 // pred_check
        _
      $region10: #{tpu_custom_call.1} parent=5 // pred_check_branch
        %339 = sbr.rel (%p336) target = $region12
      $region11: #{tpu_custom_call.1} parent=5 // pred_region
        %s340 = ssub.s32 %s22, 1
        // Predicated region
        $region13: #{tpu_custom_call.1} parent=11 // pred_check
          %p341 = pneg %p69
        $region14: #{tpu_custom_call.1} parent=11 // pred_check_branch
          %343 = sbr.rel (%p341) target = $region16
        $region15: #{tpu_custom_call.1} parent=11 // pred_region
          _
        $region16: #{tpu_custom_call.1} parent=11 // pred_fallthru
          _
        // Predicated region
        $region17: #{tpu_custom_call.1} parent=11 // pred_check
          %p344 = pneg %p90
        $region18: #{tpu_custom_call.1} parent=11 // pred_check_branch
          %346 = sbr.rel (%p344) target = $region20
        $region19: #{tpu_custom_call.1} parent=11 // pred_region
          _
        $region20: #{tpu_custom_call.1} parent=11 // pred_fallthru
          _
        // Predicated region
        $region21: #{tpu_custom_call.1} parent=11 // pred_check
          %p347 = pneg %p111
        $region22: #{tpu_custom_call.1} parent=11 // pred_check_branch
          %349 = sbr.rel (%p347) target = $region24
        $region23: #{tpu_custom_call.1} parent=11 // pred_region
          _
        $region24: #{tpu_custom_call.1} parent=11 // pred_fallthru
          _
        // Predicated region
        $region25: #{tpu_custom_call.1} parent=11 // pred_check
          %p350 = pneg %p132
        $region26: #{tpu_custom_call.1} parent=11 // pred_check_branch
          %352 = sbr.rel (%p350) target = $region28
        $region27: #{tpu_custom_call.1} parent=11 // pred_region
          _
        $region28: #{tpu_custom_call.1} parent=11 // pred_fallthru
          _
        // Predicated region
        $region29: #{tpu_custom_call.1} parent=11 // pred_check
          %p353 = pneg %p153
        $region30: #{tpu_custom_call.1} parent=11 // pred_check_branch
          %355 = sbr.rel (%p353) target = $region32
        $region31: #{tpu_custom_call.1} parent=11 // pred_region
          _
        $region32: #{tpu_custom_call.1} parent=11 // pred_fallthru
          _
        // Predicated region
        $region33: #{tpu_custom_call.1} parent=11 // pred_check
          %p356 = pneg %p174
        $region34: #{tpu_custom_call.1} parent=11 // pred_check_branch
          %358 = sbr.rel (%p356) target = $region36
        $region35: #{tpu_custom_call.1} parent=11 // pred_region
          _
        $region36: #{tpu_custom_call.1} parent=11 // pred_fallthru
          _
        // Predicated region
        $region37: #{tpu_custom_call.1} parent=11 // pred_check
          %p359 = pneg %p195
        $region38: #{tpu_custom_call.1} parent=11 // pred_check_branch
          %361 = sbr.rel (%p359) target = $region40
        $region39: #{tpu_custom_call.1} parent=11 // pred_region
          _
        $region40: #{tpu_custom_call.1} parent=11 // pred_fallthru
          _
        // Predicated region
        $region41: #{tpu_custom_call.1} parent=11 // pred_check
          %p362 = pneg %p216
        $region42: #{tpu_custom_call.1} parent=11 // pred_check_branch
          %364 = sbr.rel (%p362) target = $region44
        $region43: #{tpu_custom_call.1} parent=11 // pred_region
          _
        $region44: #{tpu_custom_call.1} parent=11 // pred_fallthru
          _
        // Predicated region
        $region45: #{tpu_custom_call.1} parent=11 // pred_check
          %p365 = pneg %p237
        $region46: #{tpu_custom_call.1} parent=11 // pred_check_branch
          %367 = sbr.rel (%p365) target = $region48
        $region47: #{tpu_custom_call.1} parent=11 // pred_region
          _
        $region48: #{tpu_custom_call.1} parent=11 // pred_fallthru
          _
        // Predicated region
        $region49: #{tpu_custom_call.1} parent=11 // pred_check
          %p368 = pneg %p258
        $region50: #{tpu_custom_call.1} parent=11 // pred_check_branch
          %370 = sbr.rel (%p368) target = $region52
        $region51: #{tpu_custom_call.1} parent=11 // pred_region
          _
        $region52: #{tpu_custom_call.1} parent=11 // pred_fallthru
          _
        // Predicated region
        $region53: #{tpu_custom_call.1} parent=11 // pred_check
          %p371 = pneg %p279
        $region54: #{tpu_custom_call.1} parent=11 // pred_check_branch
          %373 = sbr.rel (%p371) target = $region56
        $region55: #{tpu_custom_call.1} parent=11 // pred_region
          _
        $region56: #{tpu_custom_call.1} parent=11 // pred_fallthru
          _
        // Predicated region
        $region57: #{tpu_custom_call.1} parent=11 // pred_check
          %p374 = pneg %p300
        $region58: #{tpu_custom_call.1} parent=11 // pred_check_branch
          %376 = sbr.rel (%p374) target = $region60
        $region59: #{tpu_custom_call.1} parent=11 // pred_region
          _
        $region60: #{tpu_custom_call.1} parent=11 // pred_fallthru
          _
      $region12: #{tpu_custom_call.1} parent=5 // pred_fallthru
        _
      %p377 = scmp.lt.s32.totalorder %s22, 2
      // Predicated region
      $region61: #{tpu_custom_call.1} parent=5 // pred_check
        %p378 = pneg %p377
      $region62: #{tpu_custom_call.1} parent=5 // pred_check_branch
        %380 = sbr.rel (%p378) target = $region64
      $region63: #{tpu_custom_call.1} parent=5 // pred_region
        // Predicated region
        $region65: #{tpu_custom_call.1} parent=63 // pred_check
          %p381 = pneg %p42
        $region66: #{tpu_custom_call.1} parent=63 // pred_check_branch
          %383 = sbr.rel (%p381) target = $region68
        $region67: #{tpu_custom_call.1} parent=63 // pred_region
          %p384 = scmp.lt.s32.totalorder %s22, 1
          %s385 = scalar_select %p384, %s22, 1
          %s386 = smul.addr %s385, 8
          %s387 = scalar_lea.vmem %s0, %s386
        $region68: #{tpu_custom_call.1} parent=63 // pred_fallthru
          _
      $region64: #{tpu_custom_call.1} parent=5 // pred_fallthru
        _
      %p388 = scmp.le.s32.totalorder 1, %s22
      %p389 = scmp.lt.s32.totalorder %s22, 3
      %p390 = pnand %p388, %p389
      %p391 = pneg %p390
      // Predicated region
      $region69: #{tpu_custom_call.1} parent=5 // pred_check
        _
      $region70: #{tpu_custom_call.1} parent=5 // pred_check_branch
        %393 = sbr.rel (%p390) target = $region72
      $region71: #{tpu_custom_call.1} parent=5 // pred_region
        %s394 = ssub.s32 %s22, 1
        %p395 = scmp.lt.s32.totalorder %s27, 1
        %s396 = scalar_select %p395, %s27, 1
        %s397 = smul.addr %s396, 8
        %s398 = scalar_lea.vmem %s0, %s397
        %p399 = pneg %p48
        %p400 = pneg %p45
        %p401 = pneg %p69
        %p402 = pneg %p66
        %p403 = pneg %p90
        %p404 = pneg %p87
        %p405 = pneg %p111
        %p406 = pneg %p108
        %p407 = pneg %p132
        %p408 = pneg %p129
        %p409 = pneg %p153
        %p410 = pneg %p150
        %p411 = pneg %p174
        %p412 = pneg %p171
        %p413 = pneg %p195
        %p414 = pneg %p192
        %p415 = pneg %p216
        %p416 = pneg %p213
        %p417 = pneg %p237
        %p418 = pneg %p234
        %p419 = pneg %p258
        %p420 = pneg %p255
        %p421 = pneg %p279
        %p422 = pneg %p276
        %p423 = pneg %p300
        %p424 = pneg %p297
        %p425 = pneg %p326
        %p426 = pneg %p323
        %s427 = sand.u32 %s313, 1
        %s428 = scalar_lea.sflag [#allocation3], %s427
        %s429 = sand.u32 %s313, 1
        %s430 = smul.addr %s429, 8
        %s431 = scalar_lea.vmem [#allocation2], %s430
        %p432 = scmp.lt.s32.totalorder %s27, 1
        %s433 = scalar_select %p432, %s27, 1
        %s434 = smul.addr %s433, 8
        %s435 = scalar_lea.vmem %s0, %s434
        %v436 = vld [vmem:[%s435] sm:$0xff]
        %v437 = vld [vmem:[%s1] sm:$0x1]
        %v438 = vld [vmem:[%s2] sm:$0x1]
        %vm439 = vcmask 261120
        %v440 = vsel %vm439, %v436, 0.0
        %441 = vadd.xlane.f32.xlu0 %v440
        %v442 = vpop.xlane.xlu0 %441
        %v443 = vrcp.pop 32.0
        %v444 = vmul.f32 32.0, %v443
        %v445 = vsub.f32 1.0, %v444
        %v446 = vmul.f32 %v443, %v445
        %v447 = vadd.f32 %v443, %v446
        %vm448 = vweird.f32 %v443
        %v449 = vsel %vm448, %v443, %v447
        %v450 = vmul.f32 %v442, %v449
        %v451 = vsub.f32 %v436, %v450
        %v452 = vmul.f32 %v451, %v451
        %v453 = vsel %vm439, %v452, 0.0
        %454 = vadd.xlane.f32.xlu0 %v453
        %v455 = vpop.xlane.xlu0 %454
        %v456 = vmul.f32 %v455, %v449
        %v457 = vadd.f32 %v456, 1e-05
        %v458 = vrsqrt.pop %v457
        %v459 = vmul.f32 %v458, %v457
        %v460 = vmul.f32 %v459, %v458
        %v461 = vmul.f32 0.5, %v460
        %v462 = vsub.f32 1.5, %v461
        %v463 = vmul.f32 %v458, %v462
        %vm464 = vweird.f32 %v457
        %vm465 = vweird.f32 %v458
        %vm466 = vmor %vm464, %vm465
        %v467 = vsel %vm466, %v458, %v463
        %v468 = vmul.f32 %v451, %v467
        %v470 = vperm.slane %v437, 0
        %v472 = vmul.f32 %v468, %v470
        %v474 = vperm.slane %v438, 0
        %v476 = vadd.f32 %v472, %v474
        %v477 = vld [vmem:[%s3] sm:$0xff]
        %v478 = vld [vmem:[%s3 + $0x8] sm:$0xff]
        %v479 = vld [vmem:[%s3 + $0x10] sm:$0xff]
        %v480 = vld [vmem:[%s3 + $0x18] sm:$0xff]
        %v481 = vld [vmem:[%s4] sm:$0x1]
        %v483 = vperm.slane %v481, 0
        %v486 = vsel %vm439, %v476, 0
        %488 = vmatpush.msra.mxu0 0.0
        %489 = vmatpush.msra.mxu0 0.0
        %490 = vmatpush.msra.mxu0 0.0
        %491 = vmatpush.msra.mxu0 0.0
        %492 = vmatpush.msra.mxu0 0.0
        %493 = vmatpush.msra.mxu0 0.0
        %494 = vmatpush.msra.mxu0 0.0
        %495 = vmatpush.msra.mxu0 0.0
        %496 = vmatpush.msra.mxu0 0.0
        %497 = vmatpush.msra.mxu0 0.0
        %498 = vmatpush.msra.mxu0 0.0
        %499 = vmatpush.msra.mxu0 0.0
        %500 = vmatpush.msra.mxu0 %v480
        %501 = vmatpush.msra.mxu0 %v479
        %502 = vmatpush.msra.mxu0 %v478
        %503 = vmatpush.msra.mxu0 %v477
        %504 = vmatmul.f32.gmra.mxu0 %v486
        %v505 = vpop.f32.mrf.mxu0
        %v506 = vadd.f32 %v483, %v505
        %507 = vdwg.mxu0
        %v508 = vlaneseq
        %v509 = vshrl.u32 %v508, 7
        %v510 = vlaneseq
        %v511 = vand.u32 %v510, 127
        %vm512 = vcmp.le.s32.totalorder %v511, %v509
        %v513 = vsel %vm512, 0.0, -1e+30
        %515 = vrot.lane.b32.xlu0 %v506, 96
        %v516 = vpop.permute.xlu0 %515
        %vm517 = vcmask 64512
        %v518 = vsel %vm517, %v506, 0
        %v520 = vsel %vm517, %v516, 0
        %522 = vmatpush.xpose.msra.mxu0 0.0
        %523 = vmatpush.xpose.msra.mxu0 0.0
        %524 = vmatpush.xpose.msra.mxu0 0.0
        %525 = vmatpush.xpose.msra.mxu0 0.0
        %526 = vmatpush.xpose.msra.mxu0 0.0
        %527 = vmatpush.xpose.msra.mxu0 0.0
        %528 = vmatpush.xpose.msra.mxu0 0.0
        %529 = vmatpush.xpose.msra.mxu0 0.0
        %530 = vmatpush.xpose.msra.mxu0 0.0
        %531 = vmatpush.xpose.msra.mxu0 0.0
        %532 = vmatpush.xpose.msra.mxu0 0.0
        %533 = vmatpush.xpose.msra.mxu0 0.0
        %534 = vmatpush.xpose.msra.mxu0 0.0
        %535 = vmatpush.xpose.msra.mxu0 0.0
        %536 = vmatpush.xpose.msra.mxu0 0.0
        %537 = vmatpush.xpose.msra.mxu0 %v520
        %538 = vmatmul.f32.gmra.mxu0 %v518
        %v539 = vpop.f32.mrf.mxu0
        %v540 = vadd.f32 0.0, %v539
        %541 = vdwg.mxu0
        %v542 = vmul.f32 %v540, 0.35355338
        %v543 = vadd.f32 %v542, %v513
        %v544 = vsel %vm517, %v543, -inf
        %545 = vmax.xlane.f32.xlu0 %v544
        %v546 = vpop.xlane.xlu0 %545
        %v547 = vsub.f32 %v543, %v546
        %v548 = vmul.f32 %v547, 1.442695
        %v549 = vpow.pop %v548
        %v550 = vsel %vm517, %v549, 0.0
        %551 = vadd.xlane.f32.xlu0 %v550
        %v552 = vpop.xlane.xlu0 %551
        %v553 = vrcp.pop %v552
        %v554 = vmul.f32 %v549, %v553
        %555 = vrot.lane.b32.xlu0 %v506, 64
        %v556 = vpop.permute.xlu0 %555
        %v559 = vsel %vm517, %v554, 0
        %561 = vmatpush.msra.mxu0 0.0
        %562 = vmatpush.msra.mxu0 0.0
        %563 = vmatpush.msra.mxu0 0.0
        %564 = vmatpush.msra.mxu0 0.0
        %565 = vmatpush.msra.mxu0 0.0
        %566 = vmatpush.msra.mxu0 0.0
        %567 = vmatpush.msra.mxu0 0.0
        %568 = vmatpush.msra.mxu0 0.0
        %569 = vmatpush.msra.mxu0 0.0
        %570 = vmatpush.msra.mxu0 0.0
        %571 = vmatpush.msra.mxu0 0.0
        %572 = vmatpush.msra.mxu0 0.0
        %573 = vmatpush.msra.mxu0 0.0
        %574 = vmatpush.msra.mxu0 0.0
        %575 = vmatpush.msra.mxu0 0.0
        %576 = vmatpush.msra.mxu0 %v556
        %577 = vmatmul.f32.gmra.mxu0 %v559
        %v578 = vpop.f32.mrf.mxu0
        %v579 = vadd.f32 0.0, %v578
        %580 = vdwg.mxu0
        %v581 = vld [vmem:[%s5] sm:$0xff]
        %582 = vrot.lane.b32.xlu0 %v506, 120
        %v583 = vpop.permute.xlu0 %582
        %584 = vrot.lane.b32.xlu0 %v506, 88
        %v585 = vpop.permute.xlu0 %584
        %v586 = vsel %vm517, %v583, 0
        %v588 = vsel %vm517, %v585, 0
        %590 = vmatpush.xpose.msra.mxu0 0.0
        %591 = vmatpush.xpose.msra.mxu0 0.0
        %592 = vmatpush.xpose.msra.mxu0 0.0
        %593 = vmatpush.xpose.msra.mxu0 0.0
        %594 = vmatpush.xpose.msra.mxu0 0.0
        %595 = vmatpush.xpose.msra.mxu0 0.0
        %596 = vmatpush.xpose.msra.mxu0 0.0
        %597 = vmatpush.xpose.msra.mxu0 0.0
        %598 = vmatpush.xpose.msra.mxu0 0.0
        %599 = vmatpush.xpose.msra.mxu0 0.0
        %600 = vmatpush.xpose.msra.mxu0 0.0
        %601 = vmatpush.xpose.msra.mxu0 0.0
        %602 = vmatpush.xpose.msra.mxu0 0.0
        %603 = vmatpush.xpose.msra.mxu0 0.0
        %604 = vmatpush.xpose.msra.mxu0 0.0
        %605 = vmatpush.xpose.msra.mxu0 %v588
        %606 = vmatmul.f32.gmra.mxu0 %v586
        %v607 = vpop.f32.mrf.mxu0
        %v608 = vadd.f32 0.0, %v607
        %609 = vdwg.mxu0
        %v610 = vmul.f32 %v608, 0.35355338
        %v611 = vadd.f32 %v610, %v513
        %v612 = vsel %vm517, %v611, -inf
        %613 = vmax.xlane.f32.xlu0 %v612
        %v614 = vpop.xlane.xlu0 %613
        %v615 = vsub.f32 %v611, %v614
        %v616 = vmul.f32 %v615, 1.442695
        %v617 = vpow.pop %v616
        %v618 = vsel %vm517, %v617, 0.0
        %619 = vadd.xlane.f32.xlu0 %v618
        %v620 = vpop.xlane.xlu0 %619
        %v621 = vrcp.pop %v620
        %v622 = vmul.f32 %v617, %v621
        %623 = vrot.lane.b32.xlu0 %v506, 56
        %v624 = vpop.permute.xlu0 %623
        %v627 = vsel %vm517, %v622, 0
        %629 = vmatpush.msra.mxu0 0.0
        %630 = vmatpush.msra.mxu0 0.0
        %631 = vmatpush.msra.mxu0 0.0
        %632 = vmatpush.msra.mxu0 0.0
        %633 = vmatpush.msra.mxu0 0.0
        %634 = vmatpush.msra.mxu0 0.0
        %635 = vmatpush.msra.mxu0 0.0
        %636 = vmatpush.msra.mxu0 0.0
        %637 = vmatpush.msra.mxu0 0.0
        %638 = vmatpush.msra.mxu0 0.0
        %639 = vmatpush.msra.mxu0 0.0
        %640 = vmatpush.msra.mxu0 0.0
        %641 = vmatpush.msra.mxu0 0.0
        %642 = vmatpush.msra.mxu0 0.0
        %643 = vmatpush.msra.mxu0 0.0
        %644 = vmatpush.msra.mxu0 %v624
        %645 = vmatmul.f32.gmra.mxu0 %v627
        %v646 = vpop.f32.mrf.mxu0
        %v647 = vadd.f32 0.0, %v646
        %648 = vdwg.mxu0
        %v649 = vld [vmem:[%s5 + $0x8] sm:$0xff]
        %650 = vrot.lane.b32.xlu0 %v506, 112
        %v651 = vpop.permute.xlu0 %650
        %652 = vrot.lane.b32.xlu0 %v506, 80
        %v653 = vpop.permute.xlu0 %652
        %v654 = vsel %vm517, %v651, 0
        %v656 = vsel %vm517, %v653, 0
        %658 = vmatpush.xpose.msra.mxu0 0.0
        %659 = vmatpush.xpose.msra.mxu0 0.0
        %660 = vmatpush.xpose.msra.mxu0 0.0
        %661 = vmatpush.xpose.msra.mxu0 0.0
        %662 = vmatpush.xpose.msra.mxu0 0.0
        %663 = vmatpush.xpose.msra.mxu0 0.0
        %664 = vmatpush.xpose.msra.mxu0 0.0
        %665 = vmatpush.xpose.msra.mxu0 0.0
        %666 = vmatpush.xpose.msra.mxu0 0.0
        %667 = vmatpush.xpose.msra.mxu0 0.0
        %668 = vmatpush.xpose.msra.mxu0 0.0
        %669 = vmatpush.xpose.msra.mxu0 0.0
        %670 = vmatpush.xpose.msra.mxu0 0.0
        %671 = vmatpush.xpose.msra.mxu0 0.0
        %672 = vmatpush.xpose.msra.mxu0 0.0
        %673 = vmatpush.xpose.msra.mxu0 %v656
        %674 = vmatmul.f32.gmra.mxu0 %v654
        %v675 = vpop.f32.mrf.mxu0
        %v676 = vadd.f32 0.0, %v675
        %677 = vdwg.mxu0
        %v678 = vmul.f32 %v676, 0.35355338
        %v679 = vadd.f32 %v678, %v513
        %v680 = vsel %vm517, %v679, -inf
        %681 = vmax.xlane.f32.xlu0 %v680
        %v682 = vpop.xlane.xlu0 %681
        %v683 = vsub.f32 %v679, %v682
        %v684 = vmul.f32 %v683, 1.442695
        %v685 = vpow.pop %v684
        %v686 = vsel %vm517, %v685, 0.0
        %687 = vadd.xlane.f32.xlu0 %v686
        %v688 = vpop.xlane.xlu0 %687
        %v689 = vrcp.pop %v688
        %v690 = vmul.f32 %v685, %v689
        %691 = vrot.lane.b32.xlu0 %v506, 48
        %v692 = vpop.permute.xlu0 %691
        %v695 = vsel %vm517, %v690, 0
        %697 = vmatpush.msra.mxu0 0.0
        %698 = vmatpush.msra.mxu0 0.0
        %699 = vmatpush.msra.mxu0 0.0
        %700 = vmatpush.msra.mxu0 0.0
        %701 = vmatpush.msra.mxu0 0.0
        %702 = vmatpush.msra.mxu0 0.0
        %703 = vmatpush.msra.mxu0 0.0
        %704 = vmatpush.msra.mxu0 0.0
        %705 = vmatpush.msra.mxu0 0.0
        %706 = vmatpush.msra.mxu0 0.0
        %707 = vmatpush.msra.mxu0 0.0
        %708 = vmatpush.msra.mxu0 0.0
        %709 = vmatpush.msra.mxu0 0.0
        %710 = vmatpush.msra.mxu0 0.0
        %711 = vmatpush.msra.mxu0 0.0
        %712 = vmatpush.msra.mxu0 %v692
        %713 = vmatmul.f32.gmra.mxu0 %v695
        %v714 = vpop.f32.mrf.mxu0
        %v715 = vadd.f32 0.0, %v714
        %716 = vdwg.mxu0
        %v717 = vld [vmem:[%s5 + $0x10] sm:$0xff]
        %v719 = vsel %vm517, %v715, 0
        %721 = vmatpush.msra.mxu0 0.0
        %722 = vmatpush.msra.mxu0 0.0
        %723 = vmatpush.msra.mxu0 0.0
        %724 = vmatpush.msra.mxu0 0.0
        %725 = vmatpush.msra.mxu0 0.0
        %726 = vmatpush.msra.mxu0 0.0
        %727 = vmatpush.msra.mxu0 0.0
        %728 = vmatpush.msra.mxu0 0.0
        %729 = vmatpush.msra.mxu0 0.0
        %730 = vmatpush.msra.mxu0 0.0
        %731 = vmatpush.msra.mxu0 0.0
        %732 = vmatpush.msra.mxu0 0.0
        %733 = vmatpush.msra.mxu0 0.0
        %734 = vmatpush.msra.mxu0 0.0
        %735 = vmatpush.msra.mxu0 0.0
        %736 = vmatpush.msra.mxu0 %v717
        %737 = vmatmul.f32.gmra.mxu0 %v719
        %v738 = vpop.f32.mrf.mxu0
        %v739 = vadd.f32 0.0, %v738
        %740 = vdwg.mxu0
        %v742 = vsel %vm517, %v579, 0
        %744 = vmatpush.msra.mxu0 0.0
        %745 = vmatpush.msra.mxu0 0.0
        %746 = vmatpush.msra.mxu0 0.0
        %747 = vmatpush.msra.mxu0 0.0
        %748 = vmatpush.msra.mxu0 0.0
        %749 = vmatpush.msra.mxu0 0.0
        %750 = vmatpush.msra.mxu0 0.0
        %751 = vmatpush.msra.mxu0 0.0
        %752 = vmatpush.msra.mxu0 0.0
        %753 = vmatpush.msra.mxu0 0.0
        %754 = vmatpush.msra.mxu0 0.0
        %755 = vmatpush.msra.mxu0 0.0
        %756 = vmatpush.msra.mxu0 0.0
        %757 = vmatpush.msra.mxu0 0.0
        %758 = vmatpush.msra.mxu0 0.0
        %759 = vmatpush.msra.mxu0 %v581
        %760 = vmatmul.f32.gmra.mxu0 %v742
        %v761 = vpop.f32.mrf.mxu0
        %v762 = vadd.f32 %v739, %v761
        %763 = vdwg.mxu0
        %764 = vrot.lane.b32.xlu0 %v506, 104
        %v765 = vpop.permute.xlu0 %764
        %766 = vrot.lane.b32.xlu0 %v506, 72
        %v767 = vpop.permute.xlu0 %766
        %v768 = vsel %vm517, %v765, 0
        %v770 = vsel %vm517, %v767, 0
        %772 = vmatpush.xpose.msra.mxu0 0.0
        %773 = vmatpush.xpose.msra.mxu0 0.0
        %774 = vmatpush.xpose.msra.mxu0 0.0
        %775 = vmatpush.xpose.msra.mxu0 0.0
        %776 = vmatpush.xpose.msra.mxu0 0.0
        %777 = vmatpush.xpose.msra.mxu0 0.0
        %778 = vmatpush.xpose.msra.mxu0 0.0
        %779 = vmatpush.xpose.msra.mxu0 0.0
        %780 = vmatpush.xpose.msra.mxu0 0.0
        %781 = vmatpush.xpose.msra.mxu0 0.0
        %782 = vmatpush.xpose.msra.mxu0 0.0
        %783 = vmatpush.xpose.msra.mxu0 0.0
        %784 = vmatpush.xpose.msra.mxu0 0.0
        %785 = vmatpush.xpose.msra.mxu0 0.0
        %786 = vmatpush.xpose.msra.mxu0 0.0
        %787 = vmatpush.xpose.msra.mxu0 %v770
        %788 = vmatmul.f32.gmra.mxu0 %v768
        %v789 = vpop.f32.mrf.mxu0
        %v790 = vadd.f32 0.0, %v789
        %791 = vdwg.mxu0
        %v792 = vmul.f32 %v790, 0.35355338
        %v793 = vadd.f32 %v792, %v513
        %v794 = vsel %vm517, %v793, -inf
        %795 = vmax.xlane.f32.xlu0 %v794
        %v796 = vpop.xlane.xlu0 %795
        %v797 = vsub.f32 %v793, %v796
        %v798 = vmul.f32 %v797, 1.442695
        %v799 = vpow.pop %v798
        %v800 = vsel %vm517, %v799, 0.0
        %801 = vadd.xlane.f32.xlu0 %v800
        %v802 = vpop.xlane.xlu0 %801
        %v803 = vrcp.pop %v802
        %v804 = vmul.f32 %v799, %v803
        %805 = vrot.lane.b32.xlu0 %v506, 40
        %v806 = vpop.permute.xlu0 %805
        %v809 = vsel %vm517, %v804, 0
        %811 = vmatpush.msra.mxu0 0.0
        %812 = vmatpush.msra.mxu0 0.0
        %813 = vmatpush.msra.mxu0 0.0
        %814 = vmatpush.msra.mxu0 0.0
        %815 = vmatpush.msra.mxu0 0.0
        %816 = vmatpush.msra.mxu0 0.0
        %817 = vmatpush.msra.mxu0 0.0
        %818 = vmatpush.msra.mxu0 0.0
        %819 = vmatpush.msra.mxu0 0.0
        %820 = vmatpush.msra.mxu0 0.0
        %821 = vmatpush.msra.mxu0 0.0
        %822 = vmatpush.msra.mxu0 0.0
        %823 = vmatpush.msra.mxu0 0.0
        %824 = vmatpush.msra.mxu0 0.0
        %825 = vmatpush.msra.mxu0 0.0
        %826 = vmatpush.msra.mxu0 %v806
        %827 = vmatmul.f32.gmra.mxu0 %v809
        %v828 = vpop.f32.mrf.mxu0
        %v829 = vadd.f32 0.0, %v828
        %830 = vdwg.mxu0
        %v831 = vld [vmem:[%s5 + $0x18] sm:$0xff]
        %v833 = vsel %vm517, %v829, 0
        %835 = vmatpush.msra.mxu0 0.0
        %836 = vmatpush.msra.mxu0 0.0
        %837 = vmatpush.msra.mxu0 0.0
        %838 = vmatpush.msra.mxu0 0.0
        %839 = vmatpush.msra.mxu0 0.0
        %840 = vmatpush.msra.mxu0 0.0
        %841 = vmatpush.msra.mxu0 0.0
        %842 = vmatpush.msra.mxu0 0.0
        %843 = vmatpush.msra.mxu0 0.0
        %844 = vmatpush.msra.mxu0 0.0
        %845 = vmatpush.msra.mxu0 0.0
        %846 = vmatpush.msra.mxu0 0.0
        %847 = vmatpush.msra.mxu0 0.0
        %848 = vmatpush.msra.mxu0 0.0
        %849 = vmatpush.msra.mxu0 0.0
        %850 = vmatpush.msra.mxu0 %v831
        %851 = vmatmul.f32.gmra.mxu0 %v833
        %v852 = vpop.f32.mrf.mxu0
        %v853 = vadd.f32 0.0, %v852
        %854 = vdwg.mxu0
        %v856 = vsel %vm517, %v647, 0
        %858 = vmatpush.msra.mxu0 0.0
        %859 = vmatpush.msra.mxu0 0.0
        %860 = vmatpush.msra.mxu0 0.0
        %861 = vmatpush.msra.mxu0 0.0
        %862 = vmatpush.msra.mxu0 0.0
        %863 = vmatpush.msra.mxu0 0.0
        %864 = vmatpush.msra.mxu0 0.0
        %865 = vmatpush.msra.mxu0 0.0
        %866 = vmatpush.msra.mxu0 0.0
        %867 = vmatpush.msra.mxu0 0.0
        %868 = vmatpush.msra.mxu0 0.0
        %869 = vmatpush.msra.mxu0 0.0
        %870 = vmatpush.msra.mxu0 0.0
        %871 = vmatpush.msra.mxu0 0.0
        %872 = vmatpush.msra.mxu0 0.0
        %873 = vmatpush.msra.mxu0 %v649
        %874 = vmatmul.f32.gmra.mxu0 %v856
        %v875 = vpop.f32.mrf.mxu0
        %v876 = vadd.f32 %v853, %v875
        %877 = vdwg.mxu0
        %v878 = vadd.f32 %v762, %v876
        %v879 = vadd.f32 %v436, %v878
        %v880 = vld [vmem:[%s6] sm:$0x1]
        %v882 = vperm.slane %v880, 0
        %v884 = vadd.f32 %v879, %v882
        %v885 = vld [vmem:[%s7] sm:$0x1]
        %v886 = vld [vmem:[%s8] sm:$0x1]
        %v887 = vsel %vm439, %v884, 0.0
        %888 = vadd.xlane.f32.xlu0 %v887
        %v889 = vpop.xlane.xlu0 %888
        %v890 = vmul.f32 %v889, %v449
        %v891 = vsub.f32 %v884, %v890
        %v892 = vmul.f32 %v891, %v891
        %v893 = vsel %vm439, %v892, 0.0
        %894 = vadd.xlane.f32.xlu0 %v893
        %v895 = vpop.xlane.xlu0 %894
        %v896 = vmul.f32 %v895, %v449
        %v897 = vadd.f32 %v896, 1e-05
        %v898 = vrsqrt.pop %v897
        %v899 = vmul.f32 %v898, %v897
        %v900 = vmul.f32 %v899, %v898
        %v901 = vmul.f32 0.5, %v900
        %v902 = vsub.f32 1.5, %v901
        %v903 = vmul.f32 %v898, %v902
        %vm904 = vweird.f32 %v897
        %vm905 = vweird.f32 %v898
        %vm906 = vmor %vm904, %vm905
        %v907 = vsel %vm906, %v898, %v903
        %v908 = vmul.f32 %v891, %v907
        %v910 = vperm.slane %v885, 0
        %v912 = vmul.f32 %v908, %v910
        %v914 = vperm.slane %v886, 0
        %v916 = vadd.f32 %v912, %v914
        %v917 = vld [vmem:[%s9] sm:$0xff]
        %v918 = vld [vmem:[%s9 + $0x8] sm:$0xff]
        %v919 = vld [vmem:[%s9 + $0x10] sm:$0xff]
        %v920 = vld [vmem:[%s9 + $0x18] sm:$0xff]
        %v921 = vld [vmem:[%s10] sm:$0x1]
        %v923 = vperm.slane %v921, 0
        %v926 = vsel %vm439, %v916, 0
        %928 = vmatpush.msra.mxu0 0.0
        %929 = vmatpush.msra.mxu0 0.0
        %930 = vmatpush.msra.mxu0 0.0
        %931 = vmatpush.msra.mxu0 0.0
        %932 = vmatpush.msra.mxu0 0.0
        %933 = vmatpush.msra.mxu0 0.0
        %934 = vmatpush.msra.mxu0 0.0
        %935 = vmatpush.msra.mxu0 0.0
        %936 = vmatpush.msra.mxu0 0.0
        %937 = vmatpush.msra.mxu0 0.0
        %938 = vmatpush.msra.mxu0 0.0
        %939 = vmatpush.msra.mxu0 0.0
        %940 = vmatpush.msra.mxu0 %v920
        %941 = vmatpush.msra.mxu0 %v919
        %942 = vmatpush.msra.mxu0 %v918
        %943 = vmatpush.msra.mxu0 %v917
        %944 = vmatmul.f32.gmra.mxu0 %v926
        %v945 = vpop.f32.mrf.mxu0
        %v946 = vadd.f32 %v923, %v945
        %947 = vdwg.mxu0
        %v948 = vmul.f32 %v946, 0.5
        %v949 = vmul.f32 %v946, 0.044715
        %v950 = vmul.f32 %v949, %v946
        %v951 = vmul.f32 %v950, %v946
        %v952 = vadd.f32 %v946, %v951
        %v953 = vmul.f32 %v952, 0.7978846
        %v954 = vtanh.pop %v953
        %v955 = vadd.f32 %v954, 1.0
        %v956 = vmul.f32 %v948, %v955
        %v957 = vld [vmem:[%s11] sm:$0xff]
        %v958 = vld [vmem:[%s11 + $0x8] sm:$0xff]
        %v959 = vld [vmem:[%s11 + $0x10] sm:$0xff]
        %v960 = vld [vmem:[%s11 + $0x18] sm:$0xff]
        %v961 = vld [vmem:[%s11 + $0x20] sm:$0xff]
        %v962 = vld [vmem:[%s11 + $0x28] sm:$0xff]
        %v963 = vld [vmem:[%s11 + $0x30] sm:$0xff]
        %v964 = vld [vmem:[%s11 + $0x38] sm:$0xff]
        %v965 = vld [vmem:[%s11 + $0x40] sm:$0xff]
        %v966 = vld [vmem:[%s11 + $0x48] sm:$0xff]
        %v967 = vld [vmem:[%s11 + $0x50] sm:$0xff]
        %v968 = vld [vmem:[%s11 + $0x58] sm:$0xff]
        %v969 = vld [vmem:[%s11 + $0x60] sm:$0xff]
        %v970 = vld [vmem:[%s11 + $0x68] sm:$0xff]
        %v971 = vld [vmem:[%s11 + $0x70] sm:$0xff]
        %v972 = vld [vmem:[%s11 + $0x78] sm:$0xff]
        %v973 = vld [vmem:[%s12] sm:$0x1]
        %v975 = vperm.slane %v973, 0
        %977 = vmatpush.msra.mxu0 %v972
        %978 = vmatpush.msra.mxu0 %v971
        %979 = vmatpush.msra.mxu0 %v970
        %980 = vmatpush.msra.mxu0 %v969
        %981 = vmatpush.msra.mxu0 %v968
        %982 = vmatpush.msra.mxu0 %v967
        %983 = vmatpush.msra.mxu0 %v966
        %984 = vmatpush.msra.mxu0 %v965
        %985 = vmatpush.msra.mxu0 %v964
        %986 = vmatpush.msra.mxu0 %v963
        %987 = vmatpush.msra.mxu0 %v962
        %988 = vmatpush.msra.mxu0 %v961
        %989 = vmatpush.msra.mxu0 %v960
        %990 = vmatpush.msra.mxu0 %v959
        %991 = vmatpush.msra.mxu0 %v958
        %992 = vmatpush.msra.mxu0 %v957
        %993 = vmatmul.f32.gmra.mxu0 %v956
        %v994 = vpop.f32.mrf.mxu0
        %v995 = vadd.f32 %v975, %v994
        %996 = vdwg.mxu0
        %v997 = vadd.f32 %v884, %v995
        %998 = vst.msk [vmem:[%s431] sm:$0xff] %vm439, %v997
        %s999 = sand.u32 %s313, 1
        %s1000 = scalar_lea.sflag [#allocation3], %s999
        %s1001 = sand.u32 %s313, 1
        %s1002 = smul.addr %s1001, 8
        %s1003 = scalar_lea.vmem [#allocation2], %s1002
        // Predicated region
        $region73: #{tpu_custom_call.1} parent=71 // pred_check
          %p1004 = pneg %p323
        $region74: #{tpu_custom_call.1} parent=71 // pred_check_branch
          %1006 = sbr.rel (%p1004) target = $region76
        $region75: #{tpu_custom_call.1} parent=71 // pred_region
          %1008 = vsyncadd %s1000, 0
          %s1009 = smul.addr %s27, 8
          %s1010 = scalar_lea.hbm %s13, %s1009
          %s1012 = sshll.u32 %s1003, 4
          %s1013 = int_to_ptr.vmem [resolvable:$true] %s1012
          %s1014 = sshll.u32 %s1010, 4
          %s1015 = int_to_ptr.hbm [resolvable:$true] %s1014
          %1017 = dma.vmem_to_hbm [thread:$0]  %s1013, 128, %s1015, %s1000
        $region76: #{tpu_custom_call.1} parent=71 // pred_fallthru
          _
      $region72: #{tpu_custom_call.1} parent=5 // pred_fallthru
        _
      %p1018 = scmp.le.s32.totalorder 2, %s22
      // Predicated region
      $region77: #{tpu_custom_call.1} parent=5 // pred_check
        %p1019 = pneg %p1018
      $region78: #{tpu_custom_call.1} parent=5 // pred_check_branch
        %1021 = sbr.rel (%p1019) target = $region80
      $region79: #{tpu_custom_call.1} parent=5 // pred_region
        %s1022 = ssub.s32 %s22, 2
        // Predicated region
        $region81: #{tpu_custom_call.1} parent=79 // pred_check
          %p1023 = pneg %p329
        $region82: #{tpu_custom_call.1} parent=79 // pred_check_branch
          %1025 = sbr.rel (%p1023) target = $region84
        $region83: #{tpu_custom_call.1} parent=79 // pred_region
          %s1026 = sand.u32 %s314, 1
          %s1027 = scalar_lea.sflag [#allocation3], %s1026
          %s1028 = sand.u32 %s314, 1
          %s1029 = smul.addr %s1028, 8
          %s1030 = scalar_lea.vmem [#allocation2], %s1029
          %1032 = dma.done %s1027, 128
        $region84: #{tpu_custom_call.1} parent=79 // pred_fallthru
          _
      $region80: #{tpu_custom_call.1} parent=5 // pred_fallthru
        _
    $region6: #{tpu_custom_call.1} parent=1 // loop_footer
      %s26 = sadd.s32 1, %s22
    $region7: #{tpu_custom_call.1} parent=1 // loop_footer_branch
      %21 = sbr.rel target = $region3
    $region8: #{tpu_custom_call.1} parent=1 // loop_exit
      _
    %1033 = vsyncpa [#allocation3], 1
    %s1034 = scalar_lea.sflag [#allocation3], 1
    %1035 = vsyncpa %s1034, 1

</llo_original>
